<compile_context>
chip_gen: v6e
topology: v6e:2x2x1
jax: 0.10.0
libtpu: 0.0.40
codegen_flags: <defaults>
</compile_context>

<pallas_src>
import jax
import jax.numpy as jnp
from jax import lax
from jax.experimental import pallas as pl
from jax.experimental.pallas import tpu as pltpu

EPS = 1e-5      # torch BatchNorm1d default eps
LANE = 128      # lane-dense width: fc1 (100 units) and logits (num_classes) pad to this


def _shift_rows(a, k):
    """Rows r <- r+k (wrap-around).  Wrapped rows only land in conv positions that the
    floor max-pool discards, so the wrap garbage is never consumed."""
    return jnp.concatenate([a[k:, :], a[:k, :]], axis=0)


def _make_kernel(TB, L, C):
    assert L % 4 == 0, "kernel assumes sequence_length % 4 == 0"
    S1 = L // 2            # per-example row stride after pool1 (valid rows: P1)
    S2 = L // 4            # per-example row stride after pool2 (valid rows: P2)
    P1 = (L - 2) // 2
    P2 = (P1 - 2) // 2
    assert P2 >= 1, "sequence_length too small"
    N0, N1, N2 = TB * L, TB * S1, TB * S2

    def kernel(x_ref, w1_ref, t1_ref, w2_ref, t2_ref, w3_ref, b3_ref,
               w4_ref, b4_ref, out_ref, h1_s, h2_s, p2_s):
        cdt = w1_ref.dtype   # matmul compute dtype (bf16 by default)

        # ---- conv1 (+ folded BN scale): ONE stacked im2col matmul over the whole tile.
        # Row shuffling is done in f32 (proven layout path); operands cast to cdt at the
        # dot input only.
        x2d = x_ref[...].astype(jnp.float32)                              # (TB*L, C)
        slab1 = jnp.concatenate(
            [x2d, _shift_rows(x2d, 1), _shift_rows(x2d, 2)], axis=-1)     # (TB*L, 3C)
        h1_s[...] = jnp.dot(slab1.astype(cdt), w1_ref[...],
                            preferred_element_type=jnp.float32)           # (TB*L, 32)
        # maxpool(k=2) via stride-2 sublane reads; per-example stride L is even so the
        # global strided read never mixes examples.  Folded bias/BN shift + relu commute
        # with max, so they are applied once on the pooled tensor (f32).
        pooled1 = jnp.maximum(h1_s[pl.ds(0, N1, 2), :], h1_s[pl.ds(1, N1, 2), :])
        p1 = jnp.maximum(pooled1 + t1_ref[...], 0.0)                      # (TB*S1, 32)

        # ---- conv2 block, same structure.
        slab2 = jnp.concatenate(
            [p1, _shift_rows(p1, 1), _shift_rows(p1, 2)], axis=-1)        # (TB*S1, 96)
        h2_s[...] = jnp.dot(slab2.astype(cdt), w2_ref[...],
                            preferred_element_type=jnp.float32)           # (TB*S1, 64)
        pooled2 = jnp.maximum(h2_s[pl.ds(0, N2, 2), :], h2_s[pl.ds(1, N2, 2), :])
        p2_s[...] = jnp.maximum(pooled2 + t2_ref[...], 0.0)               # (TB*S2, 64)

        # ---- fc1 as an accumulated per-tap matmul (no cross-lane flatten):
        #      z[b] = sum_t p2[b, t, :] @ w3[t], w3[t] zero-padded to 128 columns.
        acc = jnp.zeros((TB, LANE), jnp.float32)
        for t in range(P2):                                   # static unroll, P2 small
            tap = p2_s[pl.ds(t, TB, S2), :].astype(cdt)                   # (TB, 64)
            acc = acc + jnp.dot(tap, w3_ref[t],
                                preferred_element_type=jnp.float32)       # (TB, 128)
        z = jnp.maximum(acc + b3_ref[...], 0.0).astype(cdt)   # lane-dense (TB, 128)
        # Dropout(p=0.5) is identity under eval/inference semantics.
        out_ref[...] = (jnp.dot(z, w4_ref[...],
                                preferred_element_type=jnp.float32) + b4_ref[...])

    return kernel


def _full_spec(a):
    nd = a.ndim
    return pl.BlockSpec(a.shape, lambda i, _nd=nd: (0,) * _nd)


def _default_batch_tile(B):
    """Generation-aware tile: one grid step on single-TC v5e/v6e; >=2 parallel steps on
    dual-TC v7x.  Always a multiple of 8 sublanes; capped so per-step VMEM stays small."""
    try:
        kind = jax.devices()[0].device_kind.lower()
        n_tc = 2 if "v7" in kind else 1
    except Exception:
        n_tc = 1
    splits = n_tc if B > 8 else 1
    tb = -(-B // splits)
    tb = -(-tb // 8) * 8
    return max(8, min(tb, 256))


def baseline_inertial_net(x, kparams, num_classes=5, batch_tile=None):
    """Eval-mode forward of BaselineInertialNet.  x: (B, L, C) float array.
    kparams: output of to_kernel_params (weights pre-folded / pre-transposed)."""
    B, L, C = x.shape
    assert L % 4 == 0, "kernel assumes sequence_length % 4 == 0"
    assert num_classes <= LANE

    cdt = kparams[0].dtype
    tb = batch_tile if batch_tile is not None else _default_batch_tile(B)
    assert tb % 8 == 0, "batch tile must be a multiple of 8"
    grid = -(-B // tb)
    b_pad = grid * tb

    x = x.astype(cdt)                      # halves x DMA bytes when cdt == bf16
    if b_pad != B:
        x = jnp.pad(x, ((0, b_pad - B), (0, 0), (0, 0)))
    x2d = x.reshape(b_pad * L, C)          # fold batch into sublanes -> big-M matmuls

    kernel = _make_kernel(tb, L, C)
    out = pl.pallas_call(
        kernel,
        out_shape=jax.ShapeDtypeStruct((b_pad, LANE), jnp.float32),
        grid=(grid,),
        in_specs=[pl.BlockSpec((tb * L, C), lambda i: (i, 0))]
                 + [_full_spec(a) for a in kparams],
        out_specs=pl.BlockSpec((tb, LANE), lambda i: (i, 0)),
        scratch_shapes=[pltpu.VMEM((tb * L, 32), jnp.float32),         # conv1 / pool1
                        pltpu.VMEM((tb * (L // 2), 64), jnp.float32),  # conv2 / pool2
                        pltpu.VMEM((tb * (L // 4), 64), jnp.float32)], # pooled features
        compiler_params=pltpu.CompilerParams(dimension_semantics=("parallel",)),
    )(x2d, *kparams)
    return out[:B, :num_classes]


def init_params(key, C, L, num_classes=5):
    """Deterministic params in PyTorch layouts (Conv1d: (O, I, K), Linear: (out, in))."""
    P2 = ((L - 2) // 2 - 2) // 2
    flat = 64 * P2
    ks = jax.random.split(key, 16)
    f32 = jnp.float32
    return dict(
        w1=0.1 * jax.random.normal(ks[0], (32, C, 3), f32),
        b1=0.1 * jax.random.normal(ks[1], (32,), f32),
        g1=jax.random.uniform(ks[2], (32,), f32, 0.5, 1.5),
        be1=0.1 * jax.random.normal(ks[3], (32,), f32),
        m1=0.1 * jax.random.normal(ks[4], (32,), f32),
        v1=jax.random.uniform(ks[5], (32,), f32, 0.5, 1.5),
        w2=0.1 * jax.random.normal(ks[6], (64, 32, 3), f32),
        b2=0.1 * jax.random.normal(ks[7], (64,), f32),
        g2=jax.random.uniform(ks[8], (64,), f32, 0.5, 1.5),
        be2=0.1 * jax.random.normal(ks[9], (64,), f32),
        m2=0.1 * jax.random.normal(ks[10], (64,), f32),
        v2=jax.random.uniform(ks[11], (64,), f32, 0.5, 1.5),
        fc1_w=0.05 * jax.random.normal(ks[12], (100, flat), f32),
        fc1_b=0.1 * jax.random.normal(ks[13], (100,), f32),
        fc2_w=0.1 * jax.random.normal(ks[14], (num_classes, 100), f32),
        fc2_b=0.1 * jax.random.normal(ks[15], (num_classes,), f32),
    )


def to_kernel_params(tp, C, L, num_classes, compute_dtype=jnp.bfloat16):
    """Fold conv bias + BN into weights/shift; transpose/pad everything to the kernel
    layout.  Matmul weights are stored in compute_dtype; shifts/biases stay f32."""
    P2 = ((L - 2) // 2 - 2) // 2
    s1 = tp["g1"] / jnp.sqrt(tp["v1"] + EPS)
    t1 = (tp["b1"] - tp["m1"]) * s1 + tp["be1"]
    s2 = tp["g2"] / jnp.sqrt(tp["v2"] + EPS)
    t2 = (tp["b2"] - tp["m2"]) * s2 + tp["be2"]
    # Conv weights (O, I, K) -> (K, I, O), fold BN scale, flatten taps to rows k*I + i.
    w1 = (jnp.transpose(tp["w1"], (2, 1, 0)) * s1[None, None, :]).reshape(3 * C, 32)
    w2 = (jnp.transpose(tp["w2"], (2, 1, 0)) * s2[None, None, :]).reshape(3 * 32, 64)
    # fc1 (100, 64*P2), torch flatten is channel-major (idx = c*P2 + t) ->
    # per-tap blocks w3[t] of shape (64, 100), zero-padded to 128 lane-dense columns.
    w3 = jnp.transpose(tp["fc1_w"].reshape(100, 64, P2), (2, 1, 0))       # (P2, 64, 100)
    w3 = jnp.pad(w3, ((0, 0), (0, 0), (0, LANE - 100)))
    b3 = jnp.pad(tp["fc1_b"], (0, LANE - 100)).reshape(1, LANE)
    # fc2 padded to a lane-dense 128x128 block (extra rows/columns are exact zeros).
    w4 = jnp.zeros((LANE, LANE), jnp.float32).at[:100, :num_classes].set(tp["fc2_w"].T)
    b4 = jnp.zeros((1, LANE), jnp.float32).at[0, :num_classes].set(tp["fc2_b"])
    cd = compute_dtype
    return (w1.astype(cd), t1.reshape(1, -1), w2.astype(cd), t2.reshape(1, -1),
            w3.astype(cd), b3, w4.astype(cd), b4)


def reference(x, tp):
    """Pure-JAX f32 reference following the PyTorch (NCL) conventions."""
    y = jnp.transpose(x, (0, 2, 1))  # (B, C, L)

    def block(y, w, b, g, be, m, v):
        y = lax.conv_general_dilated(y, w, (1,), "VALID",
                                     dimension_numbers=("NCH", "OIH", "NCH"))
        y = y + b[None, :, None]
        y = ((y - m[None, :, None]) / jnp.sqrt(v + EPS)[None, :, None]
             * g[None, :, None] + be[None, :, None])
        y = jnp.maximum(y, 0.0)
        B_, Cc, Ln = y.shape
        return jnp.max(y[:, :, :(Ln // 2) * 2].reshape(B_, Cc, Ln // 2, 2), axis=-1)

    y = block(y, tp["w1"], tp["b1"], tp["g1"], tp["be1"], tp["m1"], tp["v1"])
    y = block(y, tp["w2"], tp["b2"], tp["g2"], tp["be2"], tp["m2"], tp["v2"])
    flat = y.reshape(y.shape[0], -1)
    z = jnp.maximum(flat @ tp["fc1_w"].T + tp["fc1_b"], 0.0)
    return z @ tp["fc2_w"].T + tp["fc2_b"]


if __name__ == "__main__":
    B, L, C, NC = 8, 32, 4, 5        # batch, sequence_length, num_channels, num_classes
    key = jax.random.PRNGKey(0)
    kx, kp = jax.random.split(key)
    x = jax.random.normal(kx, (B, L, C), jnp.float32)
    tp = init_params(kp, C, L, NC)
    ref = jax.block_until_ready(reference(x, tp))

    # Default (bf16 MXU-input) path; bf16 operand rounding at these scales gives ~1e-3
    # absolute error on the logits, so use a loose tolerance here.
    kp_bf16 = to_kernel_params(tp, C, L, NC, compute_dtype=jnp.bfloat16)
    out_bf16 = jax.block_until_ready(baseline_inertial_net(x, kp_bf16, num_classes=NC))
    assert out_bf16.shape == (B, NC), out_bf16.shape
    if not jnp.allclose(out_bf16, ref, atol=2e-2, rtol=2e-2):
        raise AssertionError("bf16 path mismatch vs reference: max abs err "
                             f"{float(jnp.max(jnp.abs(out_bf16 - ref)))}")

    # Full-f32 path with a tight tolerance; also exercises grid > 1 and batch padding
    # (B=12 with batch_tile=8 -> 2 grid steps, 4 padded examples sliced off).
    kp_f32 = to_kernel_params(tp, C, L, NC, compute_dtype=jnp.float32)
    xb = jnp.concatenate([x, x[:4]], axis=0)
    refb = jnp.concatenate([ref, ref[:4]], axis=0)
    out_f32 = jax.block_until_ready(
        baseline_inertial_net(xb, kp_f32, num_classes=NC, batch_tile=8))
    assert out_f32.shape == (12, NC), out_f32.shape
    if not jnp.allclose(out_f32, refb, atol=2e-3, rtol=2e-3):
        raise AssertionError("f32 path mismatch vs reference: max abs err "
                             f"{float(jnp.max(jnp.abs(out_f32 - refb)))}")

    print("KERNEL_OK")
</pallas_src>

<mosaic_0001>
module attributes {stable_mosaic.version = 11 : i64} {
  func.func @kernel(%arg0: i32, %arg1: memref<256x4xbf16, #tpu.memory_space<vmem>>, %arg2: memref<12x32xbf16, #tpu.memory_space<vmem>>, %arg3: memref<1x32xf32, #tpu.memory_space<vmem>>, %arg4: memref<96x64xbf16, #tpu.memory_space<vmem>>, %arg5: memref<1x64xf32, #tpu.memory_space<vmem>>, %arg6: memref<6x64x128xbf16, #tpu.memory_space<vmem>>, %arg7: memref<1x128xf32, #tpu.memory_space<vmem>>, %arg8: memref<128x128xbf16, #tpu.memory_space<vmem>>, %arg9: memref<1x128xf32, #tpu.memory_space<vmem>>, %arg10: memref<8x128xf32, #tpu.memory_space<vmem>>, %arg11: memref<256x32xf32, #tpu.memory_space<vmem>>, %arg12: memref<128x64xf32, #tpu.memory_space<vmem>>, %arg13: memref<64x64xf32, #tpu.memory_space<vmem>>) attributes {dimension_semantics = [#tpu.dimension_semantics<parallel>], iteration_bounds = array<i64: 1>, scalar_prefetch = 0 : i64, scratch_operands = 3 : i64, tpu.core_type = #tpu.core_type<tc>, window_params = [{transform_indices = @transform_0, window_bounds = array<i64: 256, 4>}, {pipeline_mode = #tpu.pipeline_mode<synchronous>, transform_indices = @transform_1, window_bounds = array<i64: 12, 32>}, {pipeline_mode = #tpu.pipeline_mode<synchronous>, transform_indices = @transform_2, window_bounds = array<i64: 1, 32>}, {pipeline_mode = #tpu.pipeline_mode<synchronous>, transform_indices = @transform_3, window_bounds = array<i64: 96, 64>}, {pipeline_mode = #tpu.pipeline_mode<synchronous>, transform_indices = @transform_4, window_bounds = array<i64: 1, 64>}, {pipeline_mode = #tpu.pipeline_mode<synchronous>, transform_indices = @transform_5, window_bounds = array<i64: 6, 64, 128>}, {pipeline_mode = #tpu.pipeline_mode<synchronous>, transform_indices = @transform_6, window_bounds = array<i64: 1, 128>}, {pipeline_mode = #tpu.pipeline_mode<synchronous>, transform_indices = @transform_7, window_bounds = array<i64: 128, 128>}, {pipeline_mode = #tpu.pipeline_mode<synchronous>, transform_indices = @transform_8, window_bounds = array<i64: 1, 128>}, {transform_indices = @transform_9, window_bounds = array<i64: 8, 128>}]} {
    %c0 = arith.constant 0 : index
    %c0_0 = arith.constant 0 : index
    %0 = vector.load %arg1[%c0, %c0_0] : memref<256x4xbf16, #tpu.memory_space<vmem>>, vector<256x4xbf16>
    %1 = arith.extf %0 : vector<256x4xbf16> to vector<256x4xf32>
    %2 = vector.extract_strided_slice %1 {offsets = [1, 0], sizes = [255, 4], strides = [1, 1]} : vector<256x4xf32> to vector<255x4xf32>
    %3 = vector.extract_strided_slice %1 {offsets = [0, 0], sizes = [1, 4], strides = [1, 1]} : vector<256x4xf32> to vector<1x4xf32>
    %4 = tpu.concatenate %2, %3 in 0 : vector<255x4xf32>, vector<1x4xf32> -> vector<256x4xf32>
    %5 = vector.extract_strided_slice %1 {offsets = [2, 0], sizes = [254, 4], strides = [1, 1]} : vector<256x4xf32> to vector<254x4xf32>
    %6 = vector.extract_strided_slice %1 {offsets = [0, 0], sizes = [2, 4], strides = [1, 1]} : vector<256x4xf32> to vector<2x4xf32>
    %7 = tpu.concatenate %5, %6 in 0 : vector<254x4xf32>, vector<2x4xf32> -> vector<256x4xf32>
    %8 = tpu.concatenate %1, %4, %7 in 1 : vector<256x4xf32>, vector<256x4xf32>, vector<256x4xf32> -> vector<256x12xf32>
    %9 = arith.truncf %8 : vector<256x12xf32> to vector<256x12xbf16>
    %c0_1 = arith.constant 0 : index
    %c0_2 = arith.constant 0 : index
    %10 = vector.load %arg2[%c0_1, %c0_2] : memref<12x32xbf16, #tpu.memory_space<vmem>>, vector<12x32xbf16>
    %cst = arith.constant dense<0.000000e+00> : vector<256x32xf32>
    %11 = tpu.matmul %9, %10, %cst {dimension_numbers = #tpu.dot_dimension_numbers<[1], [0], [0], [1], [0, 0, 1, 1], [], []>} : vector<256x12xbf16>, vector<12x32xbf16>, vector<256x32xf32> -> vector<256x32xf32>
    %c0_3 = arith.constant 0 : index
    %c0_4 = arith.constant 0 : index
    %12 = vector.load %arg11[%c0_3, %c0_4] : memref<256x32xf32, #tpu.memory_space<vmem>>, vector<256x32xf32>
    tpu.vector_store %arg11[%c0_3, %c0_4], %11 {strides = array<i32>} : memref<256x32xf32, #tpu.memory_space<vmem>>, vector<256x32xf32>,
    %c0_5 = arith.constant 0 : index
    %c0_6 = arith.constant 0 : index
    %13 = tpu.strided_load %arg11[%c0_5, %c0_6] {strides = array<i32: 2, 1>} : memref<256x32xf32, #tpu.memory_space<vmem>>, vector<128x32xf32>
    %c1 = arith.constant 1 : index
    %c0_7 = arith.constant 0 : index
    %14 = tpu.strided_load %arg11[%c1, %c0_7] {strides = array<i32: 2, 1>} : memref<256x32xf32, #tpu.memory_space<vmem>>, vector<128x32xf32>
    %15 = arith.maximumf %13, %14 : vector<128x32xf32>
    %c0_8 = arith.constant 0 : index
    %c0_9 = arith.constant 0 : index
    %16 = vector.load %arg3[%c0_8, %c0_9] : memref<1x32xf32, #tpu.memory_space<vmem>>, vector<1x32xf32>
    %17 = vector.broadcast %16 : vector<1x32xf32> to vector<128x32xf32>
    %18 = arith.addf %15, %17 : vector<128x32xf32>
    %cst_10 = arith.constant 0.000000e+00 : f32
    %19 = vector.broadcast %cst_10 : f32 to vector<128x32xf32>
    %20 = arith.maximumf %18, %19 : vector<128x32xf32>
    %21 = vector.extract_strided_slice %20 {offsets = [1, 0], sizes = [127, 32], strides = [1, 1]} : vector<128x32xf32> to vector<127x32xf32>
    %22 = vector.extract_strided_slice %20 {offsets = [0, 0], sizes = [1, 32], strides = [1, 1]} : vector<128x32xf32> to vector<1x32xf32>
    %23 = tpu.concatenate %21, %22 in 0 : vector<127x32xf32>, vector<1x32xf32> -> vector<128x32xf32>
    %24 = vector.extract_strided_slice %20 {offsets = [2, 0], sizes = [126, 32], strides = [1, 1]} : vector<128x32xf32> to vector<126x32xf32>
    %25 = vector.extract_strided_slice %20 {offsets = [0, 0], sizes = [2, 32], strides = [1, 1]} : vector<128x32xf32> to vector<2x32xf32>
    %26 = tpu.concatenate %24, %25 in 0 : vector<126x32xf32>, vector<2x32xf32> -> vector<128x32xf32>
    %27 = tpu.concatenate %20, %23, %26 in 1 : vector<128x32xf32>, vector<128x32xf32>, vector<128x32xf32> -> vector<128x96xf32>
    %28 = arith.truncf %27 : vector<128x96xf32> to vector<128x96xbf16>
    %c0_11 = arith.constant 0 : index
    %c0_12 = arith.constant 0 : index
    %29 = vector.load %arg4[%c0_11, %c0_12] : memref<96x64xbf16, #tpu.memory_space<vmem>>, vector<96x64xbf16>
    %cst_13 = arith.constant dense<0.000000e+00> : vector<128x64xf32>
    %30 = tpu.matmul %28, %29, %cst_13 {dimension_numbers = #tpu.dot_dimension_numbers<[1], [0], [0], [1], [0, 0, 1, 1], [], []>} : vector<128x96xbf16>, vector<96x64xbf16>, vector<128x64xf32> -> vector<128x64xf32>
    %c0_14 = arith.constant 0 : index
    %c0_15 = arith.constant 0 : index
    %31 = vector.load %arg12[%c0_14, %c0_15] : memref<128x64xf32, #tpu.memory_space<vmem>>, vector<128x64xf32>
    tpu.vector_store %arg12[%c0_14, %c0_15], %30 {strides = array<i32>} : memref<128x64xf32, #tpu.memory_space<vmem>>, vector<128x64xf32>,
    %c0_16 = arith.constant 0 : index
    %c0_17 = arith.constant 0 : index
    %32 = tpu.strided_load %arg12[%c0_16, %c0_17] {strides = array<i32: 2, 1>} : memref<128x64xf32, #tpu.memory_space<vmem>>, vector<64x64xf32>
    %c1_18 = arith.constant 1 : index
    %c0_19 = arith.constant 0 : index
    %33 = tpu.strided_load %arg12[%c1_18, %c0_19] {strides = array<i32: 2, 1>} : memref<128x64xf32, #tpu.memory_space<vmem>>, vector<64x64xf32>
    %34 = arith.maximumf %32, %33 : vector<64x64xf32>
    %c0_20 = arith.constant 0 : index
    %c0_21 = arith.constant 0 : index
    %35 = vector.load %arg5[%c0_20, %c0_21] : memref<1x64xf32, #tpu.memory_space<vmem>>, vector<1x64xf32>
    %36 = vector.broadcast %35 : vector<1x64xf32> to vector<64x64xf32>
    %37 = arith.addf %34, %36 : vector<64x64xf32>
    %cst_22 = arith.constant 0.000000e+00 : f32
    %38 = vector.broadcast %cst_22 : f32 to vector<64x64xf32>
    %39 = arith.maximumf %37, %38 : vector<64x64xf32>
    %c0_23 = arith.constant 0 : index
    %c0_24 = arith.constant 0 : index
    %40 = vector.load %arg13[%c0_23, %c0_24] : memref<64x64xf32, #tpu.memory_space<vmem>>, vector<64x64xf32>
    tpu.vector_store %arg13[%c0_23, %c0_24], %39 {strides = array<i32>} : memref<64x64xf32, #tpu.memory_space<vmem>>, vector<64x64xf32>,
    %cst_25 = arith.constant 0.000000e+00 : f32
    %41 = vector.broadcast %cst_25 : f32 to vector<8x128xf32>
    %c0_26 = arith.constant 0 : index
    %c0_27 = arith.constant 0 : index
    %42 = tpu.strided_load %arg13[%c0_26, %c0_27] {strides = array<i32: 8, 1>} : memref<64x64xf32, #tpu.memory_space<vmem>>, vector<8x64xf32>
    %43 = arith.truncf %42 : vector<8x64xf32> to vector<8x64xbf16>
    %c0_28 = arith.constant 0 : index
    %c0_29 = arith.constant 0 : index
    %c0_30 = arith.constant 0 : index
    %44 = vector.load %arg6[%c0_28, %c0_29, %c0_30] : memref<6x64x128xbf16, #tpu.memory_space<vmem>>, vector<1x64x128xbf16>
    %45 = vector.shape_cast %44 : vector<1x64x128xbf16> to vector<64x128xbf16>
    %cst_31 = arith.constant dense<0.000000e+00> : vector<8x128xf32>
    %46 = tpu.matmul %43, %45, %cst_31 {dimension_numbers = #tpu.dot_dimension_numbers<[1], [0], [0], [1], [0, 0, 1, 1], [], []>} : vector<8x64xbf16>, vector<64x128xbf16>, vector<8x128xf32> -> vector<8x128xf32>
    %47 = arith.addf %41, %46 : vector<8x128xf32>
    %c1_32 = arith.constant 1 : index
    %c0_33 = arith.constant 0 : index
    %48 = tpu.strided_load %arg13[%c1_32, %c0_33] {strides = array<i32: 8, 1>} : memref<64x64xf32, #tpu.memory_space<vmem>>, vector<8x64xf32>
    %49 = arith.truncf %48 : vector<8x64xf32> to vector<8x64xbf16>
    %c1_34 = arith.constant 1 : index
    %c0_35 = arith.constant 0 : index
    %c0_36 = arith.constant 0 : index
    %50 = vector.load %arg6[%c1_34, %c0_35, %c0_36] : memref<6x64x128xbf16, #tpu.memory_space<vmem>>, vector<1x64x128xbf16>
    %51 = vector.shape_cast %50 : vector<1x64x128xbf16> to vector<64x128xbf16>
    %cst_37 = arith.constant dense<0.000000e+00> : vector<8x128xf32>
    %52 = tpu.matmul %49, %51, %cst_37 {dimension_numbers = #tpu.dot_dimension_numbers<[1], [0], [0], [1], [0, 0, 1, 1], [], []>} : vector<8x64xbf16>, vector<64x128xbf16>, vector<8x128xf32> -> vector<8x128xf32>
    %53 = arith.addf %47, %52 : vector<8x128xf32>
    %c2 = arith.constant 2 : index
    %c0_38 = arith.constant 0 : index
    %54 = tpu.strided_load %arg13[%c2, %c0_38] {strides = array<i32: 8, 1>} : memref<64x64xf32, #tpu.memory_space<vmem>>, vector<8x64xf32>
    %55 = arith.truncf %54 : vector<8x64xf32> to vector<8x64xbf16>
    %c2_39 = arith.constant 2 : index
    %c0_40 = arith.constant 0 : index
    %c0_41 = arith.constant 0 : index
    %56 = vector.load %arg6[%c2_39, %c0_40, %c0_41] : memref<6x64x128xbf16, #tpu.memory_space<vmem>>, vector<1x64x128xbf16>
    %57 = vector.shape_cast %56 : vector<1x64x128xbf16> to vector<64x128xbf16>
    %cst_42 = arith.constant dense<0.000000e+00> : vector<8x128xf32>
    %58 = tpu.matmul %55, %57, %cst_42 {dimension_numbers = #tpu.dot_dimension_numbers<[1], [0], [0], [1], [0, 0, 1, 1], [], []>} : vector<8x64xbf16>, vector<64x128xbf16>, vector<8x128xf32> -> vector<8x128xf32>
    %59 = arith.addf %53, %58 : vector<8x128xf32>
    %c3 = arith.constant 3 : index
    %c0_43 = arith.constant 0 : index
    %60 = tpu.strided_load %arg13[%c3, %c0_43] {strides = array<i32: 8, 1>} : memref<64x64xf32, #tpu.memory_space<vmem>>, vector<8x64xf32>
    %61 = arith.truncf %60 : vector<8x64xf32> to vector<8x64xbf16>
    %c3_44 = arith.constant 3 : index
    %c0_45 = arith.constant 0 : index
    %c0_46 = arith.constant 0 : index
    %62 = vector.load %arg6[%c3_44, %c0_45, %c0_46] : memref<6x64x128xbf16, #tpu.memory_space<vmem>>, vector<1x64x128xbf16>
    %63 = vector.shape_cast %62 : vector<1x64x128xbf16> to vector<64x128xbf16>
    %cst_47 = arith.constant dense<0.000000e+00> : vector<8x128xf32>
    %64 = tpu.matmul %61, %63, %cst_47 {dimension_numbers = #tpu.dot_dimension_numbers<[1], [0], [0], [1], [0, 0, 1, 1], [], []>} : vector<8x64xbf16>, vector<64x128xbf16>, vector<8x128xf32> -> vector<8x128xf32>
    %65 = arith.addf %59, %64 : vector<8x128xf32>
    %c4 = arith.constant 4 : index
    %c0_48 = arith.constant 0 : index
    %66 = tpu.strided_load %arg13[%c4, %c0_48] {strides = array<i32: 8, 1>} : memref<64x64xf32, #tpu.memory_space<vmem>>, vector<8x64xf32>
    %67 = arith.truncf %66 : vector<8x64xf32> to vector<8x64xbf16>
    %c4_49 = arith.constant 4 : index
    %c0_50 = arith.constant 0 : index
    %c0_51 = arith.constant 0 : index
    %68 = vector.load %arg6[%c4_49, %c0_50, %c0_51] : memref<6x64x128xbf16, #tpu.memory_space<vmem>>, vector<1x64x128xbf16>
    %69 = vector.shape_cast %68 : vector<1x64x128xbf16> to vector<64x128xbf16>
    %cst_52 = arith.constant dense<0.000000e+00> : vector<8x128xf32>
    %70 = tpu.matmul %67, %69, %cst_52 {dimension_numbers = #tpu.dot_dimension_numbers<[1], [0], [0], [1], [0, 0, 1, 1], [], []>} : vector<8x64xbf16>, vector<64x128xbf16>, vector<8x128xf32> -> vector<8x128xf32>
    %71 = arith.addf %65, %70 : vector<8x128xf32>
    %c5 = arith.constant 5 : index
    %c0_53 = arith.constant 0 : index
    %72 = tpu.strided_load %arg13[%c5, %c0_53] {strides = array<i32: 8, 1>} : memref<64x64xf32, #tpu.memory_space<vmem>>, vector<8x64xf32>
    %73 = arith.truncf %72 : vector<8x64xf32> to vector<8x64xbf16>
    %c5_54 = arith.constant 5 : index
    %c0_55 = arith.constant 0 : index
    %c0_56 = arith.constant 0 : index
    %74 = vector.load %arg6[%c5_54, %c0_55, %c0_56] : memref<6x64x128xbf16, #tpu.memory_space<vmem>>, vector<1x64x128xbf16>
    %75 = vector.shape_cast %74 : vector<1x64x128xbf16> to vector<64x128xbf16>
    %cst_57 = arith.constant dense<0.000000e+00> : vector<8x128xf32>
    %76 = tpu.matmul %73, %75, %cst_57 {dimension_numbers = #tpu.dot_dimension_numbers<[1], [0], [0], [1], [0, 0, 1, 1], [], []>} : vector<8x64xbf16>, vector<64x128xbf16>, vector<8x128xf32> -> vector<8x128xf32>
    %77 = arith.addf %71, %76 : vector<8x128xf32>
    %c0_58 = arith.constant 0 : index
    %c0_59 = arith.constant 0 : index
    %78 = vector.load %arg7[%c0_58, %c0_59] : memref<1x128xf32, #tpu.memory_space<vmem>>, vector<1x128xf32>
    %79 = vector.broadcast %78 : vector<1x128xf32> to vector<8x128xf32>
    %80 = arith.addf %77, %79 : vector<8x128xf32>
    %cst_60 = arith.constant 0.000000e+00 : f32
    %81 = vector.broadcast %cst_60 : f32 to vector<8x128xf32>
    %82 = arith.maximumf %80, %81 : vector<8x128xf32>
    %83 = arith.truncf %82 : vector<8x128xf32> to vector<8x128xbf16>
    %c0_61 = arith.constant 0 : index
    %c0_62 = arith.constant 0 : index
    %84 = vector.load %arg8[%c0_61, %c0_62] : memref<128x128xbf16, #tpu.memory_space<vmem>>, vector<128x128xbf16>
    %cst_63 = arith.constant dense<0.000000e+00> : vector<8x128xf32>
    %85 = tpu.matmul %83, %84, %cst_63 {dimension_numbers = #tpu.dot_dimension_numbers<[1], [0], [0], [1], [0, 0, 1, 1], [], []>} : vector<8x128xbf16>, vector<128x128xbf16>, vector<8x128xf32> -> vector<8x128xf32>
    %c0_64 = arith.constant 0 : index
    %c0_65 = arith.constant 0 : index
    %86 = vector.load %arg9[%c0_64, %c0_65] : memref<1x128xf32, #tpu.memory_space<vmem>>, vector<1x128xf32>
    %87 = vector.broadcast %86 : vector<1x128xf32> to vector<8x128xf32>
    %88 = arith.addf %85, %87 : vector<8x128xf32>
    %c0_66 = arith.constant 0 : index
    %c0_67 = arith.constant 0 : index
    %89 = vector.load %arg10[%c0_66, %c0_67] : memref<8x128xf32, #tpu.memory_space<vmem>>, vector<8x128xf32>
    tpu.vector_store %arg10[%c0_66, %c0_67], %88 {strides = array<i32>} : memref<8x128xf32, #tpu.memory_space<vmem>>, vector<8x128xf32>,
    return
  }
  func.func @transform_0(%arg0: i32) -> (i32, i32) {
    %c0_i32 = arith.constant 0 : i32
    %c0_i32_0 = arith.constant 0 : i32
    return %arg0, %c0_i32 : i32, i32
  }
  func.func @transform_1(%arg0: i32) -> (i32, i32) {
    %c0_i32 = arith.constant 0 : i32
    %c0_i32_0 = arith.constant 0 : i32
    %c0_i32_1 = arith.constant 0 : i32
    return %c0_i32, %c0_i32_0 : i32, i32
  }
  func.func @transform_2(%arg0: i32) -> (i32, i32) {
    %c0_i32 = arith.constant 0 : i32
    %c0_i32_0 = arith.constant 0 : i32
    %c0_i32_1 = arith.constant 0 : i32
    return %c0_i32, %c0_i32_0 : i32, i32
  }
  func.func @transform_3(%arg0: i32) -> (i32, i32) {
    %c0_i32 = arith.constant 0 : i32
    %c0_i32_0 = arith.constant 0 : i32
    %c0_i32_1 = arith.constant 0 : i32
    return %c0_i32, %c0_i32_0 : i32, i32
  }
  func.func @transform_4(%arg0: i32) -> (i32, i32) {
    %c0_i32 = arith.constant 0 : i32
    %c0_i32_0 = arith.constant 0 : i32
    %c0_i32_1 = arith.constant 0 : i32
    return %c0_i32, %c0_i32_0 : i32, i32
  }
  func.func @transform_5(%arg0: i32) -> (i32, i32, i32) {
    %c0_i32 = arith.constant 0 : i32
    %c0_i32_0 = arith.constant 0 : i32
    %c0_i32_1 = arith.constant 0 : i32
    %c0_i32_2 = arith.constant 0 : i32
    return %c0_i32, %c0_i32_0, %c0_i32_1 : i32, i32, i32
  }
  func.func @transform_6(%arg0: i32) -> (i32, i32) {
    %c0_i32 = arith.constant 0 : i32
    %c0_i32_0 = arith.constant 0 : i32
    %c0_i32_1 = arith.constant 0 : i32
    return %c0_i32, %c0_i32_0 : i32, i32
  }
  func.func @transform_7(%arg0: i32) -> (i32, i32) {
    %c0_i32 = arith.constant 0 : i32
    %c0_i32_0 = arith.constant 0 : i32
    %c0_i32_1 = arith.constant 0 : i32
    return %c0_i32, %c0_i32_0 : i32, i32
  }
  func.func @transform_8(%arg0: i32) -> (i32, i32) {
    %c0_i32 = arith.constant 0 : i32
    %c0_i32_0 = arith.constant 0 : i32
    %c0_i32_1 = arith.constant 0 : i32
    return %c0_i32, %c0_i32_0 : i32, i32
  }
  func.func @transform_9(%arg0: i32) -> (i32, i32) {
    %c0_i32 = arith.constant 0 : i32
    %c0_i32_0 = arith.constant 0 : i32
    return %arg0, %c0_i32 : i32, i32
  }
}

</mosaic_0001>

<llo_original>
// kernel: tpu_custom_call.1
$region0: #{tpu_custom_call.1}
  #allocation0 [shape = 'u32[]', space=smem, size = 0x4, offset = 0x4, fixed_abs, tag = 'smem constant byte address 0x4 - core index']
  #allocation1 [shape = 'u32[144,128]{1,0:T(1,128)}', space=vmem, size = 0x12000, scoped, tag = 'internal scratch']
  #allocation2 [shape = 'f32[256,32]{1,0:T(8,128)}', space=vmem, size = 0x20000, scoped, tag = 'scratch operand']
  #allocation3 [shape = 'f32[128,64]{1,0:T(8,128)}', space=vmem, size = 0x10000, scoped, tag = 'scratch operand']
  #allocation4 [shape = 'f32[64,64]{1,0:T(8,128)}', space=vmem, size = 0x8000, scoped, tag = 'scratch operand']
  %s0 = inlined_call_operand.vmem [shape: bf16[256,4], index: 0, kind: input, shape index: {}]
  %s1 = inlined_call_operand.vmem [shape: bf16[12,32], index: 1, kind: input, shape index: {}]
  %s2 = inlined_call_operand.vmem [shape: f32[1,32], index: 2, kind: input, shape index: {}]
  %s3 = inlined_call_operand.vmem [shape: bf16[96,64], index: 3, kind: input, shape index: {}]
  %s4 = inlined_call_operand.vmem [shape: f32[1,64], index: 4, kind: input, shape index: {}]
  %s5 = inlined_call_operand.vmem [shape: bf16[6,64,128], index: 5, kind: input, shape index: {}]
  %s6 = inlined_call_operand.vmem [shape: f32[1,128], index: 6, kind: input, shape index: {}]
  %s7 = inlined_call_operand.hbm [shape: bf16[128,128], index: 7, kind: input, shape index: {}]
  %s8 = inlined_call_operand.vmem [shape: f32[1,128], index: 8, kind: input, shape index: {}]
  %s9 = inlined_call_operand.hbm [shape: f32[8,128], index: 9, kind: output, shape index: {}]
  %s10 = sld [smem:[#allocation0]]
  $region50: #{tpu_custom_call.1} parent=0
    _
  %s12 = ssub.s32 1, %s10
  %s13 = scalar_select 0, %s12, %s10
  $region1: #{tpu_custom_call.1} parent=0
    #allocation5 [shape = 'u8[32768]{0}', space=vmem, size = 0x8000, scoped, tag = 'input window, operand 7, single buffered']
    #allocation6 [shape = 's32[1]{0}', space=sflag, size = 0x4, scoped, tag = 'scoped memory for tpu_custom_call.1']
    #allocation7 [shape = 's32[1]{0}', space=sflag, size = 0x4, scoped, tag = 'scoped memory for tpu_custom_call.1']
    #allocation8 [shape = 'u8[4096]{0}', space=vmem, size = 0x1000, scoped, tag = 'output window, operand 0, single buffered']
    %14 = vsyncpa [#allocation6], 0
    %15 = vsyncpa [#allocation7], 0
    // Predicated region
    $region2: #{tpu_custom_call.1} parent=1 // pred_check
      _
    $region3: #{tpu_custom_call.1} parent=1 // pred_check_branch
      %17 = sbr.rel (0) target = $region5
    $region4: #{tpu_custom_call.1} parent=1 // pred_region
      _
    $region5: #{tpu_custom_call.1} parent=1 // pred_fallthru
      _
    // Predicated region
    $region6: #{tpu_custom_call.1} parent=1 // pred_check
      _
    $region7: #{tpu_custom_call.1} parent=1 // pred_check_branch
      %19 = sbr.rel (0) target = $region9
    $region8: #{tpu_custom_call.1} parent=1 // pred_region
      _
    $region9: #{tpu_custom_call.1} parent=1 // pred_fallthru
      _
    // Predicated region
    $region10: #{tpu_custom_call.1} parent=1 // pred_check
      _
    $region11: #{tpu_custom_call.1} parent=1 // pred_check_branch
      %21 = sbr.rel (0) target = $region13
    $region12: #{tpu_custom_call.1} parent=1 // pred_region
      _
    $region13: #{tpu_custom_call.1} parent=1 // pred_fallthru
      _
    // Predicated region
    $region14: #{tpu_custom_call.1} parent=1 // pred_check
      _
    $region15: #{tpu_custom_call.1} parent=1 // pred_check_branch
      %23 = sbr.rel (0) target = $region17
    $region16: #{tpu_custom_call.1} parent=1 // pred_region
      _
    $region17: #{tpu_custom_call.1} parent=1 // pred_fallthru
      _
    // Predicated region
    $region18: #{tpu_custom_call.1} parent=1 // pred_check
      _
    $region19: #{tpu_custom_call.1} parent=1 // pred_check_branch
      %25 = sbr.rel (0) target = $region21
    $region20: #{tpu_custom_call.1} parent=1 // pred_region
      _
    $region21: #{tpu_custom_call.1} parent=1 // pred_fallthru
      _
    // Predicated region
    $region22: #{tpu_custom_call.1} parent=1 // pred_check
      _
    $region23: #{tpu_custom_call.1} parent=1 // pred_check_branch
      %27 = sbr.rel (0) target = $region25
    $region24: #{tpu_custom_call.1} parent=1 // pred_region
      _
    $region25: #{tpu_custom_call.1} parent=1 // pred_fallthru
      _
    // Predicated region
    $region26: #{tpu_custom_call.1} parent=1 // pred_check
      _
    $region27: #{tpu_custom_call.1} parent=1 // pred_check_branch
      %29 = sbr.rel (0) target = $region29
    $region28: #{tpu_custom_call.1} parent=1 // pred_region
      _
    $region29: #{tpu_custom_call.1} parent=1 // pred_fallthru
      _
    // Predicated region
    $region30: #{tpu_custom_call.1} parent=1 // pred_check
      _
    $region31: #{tpu_custom_call.1} parent=1 // pred_check_branch
      %31 = sbr.rel (0) target = $region33
    $region32: #{tpu_custom_call.1} parent=1 // pred_region
      %s33 = ssub.s32 1024, 1024
      %34 = vsyncadd [#allocation6], %s33
      %s35 = sshll.u32 [#allocation5], 4
      %s36 = int_to_ptr.vmem [resolvable:$true] %s35
      %41 = dma.hbm_to_vmem [thread:$0]  %s7, 1024, %s36, [#allocation6], 64, 64, 4
    $region33: #{tpu_custom_call.1} parent=1 // pred_fallthru
      _
    // Predicated region
    $region34: #{tpu_custom_call.1} parent=1 // pred_check
      _
    $region35: #{tpu_custom_call.1} parent=1 // pred_check_branch
      %43 = sbr.rel (0) target = $region37
    $region36: #{tpu_custom_call.1} parent=1 // pred_region
      _
    $region37: #{tpu_custom_call.1} parent=1 // pred_fallthru
      _
    // Predicated region
    $region38: #{tpu_custom_call.1} parent=1 // pred_check
      _
    $region39: #{tpu_custom_call.1} parent=1 // pred_check_branch
      %45 = sbr.rel (0) target = $region41
    $region40: #{tpu_custom_call.1} parent=1 // pred_region
      %46 = dma.done [#allocation6], 1024
    $region41: #{tpu_custom_call.1} parent=1 // pred_fallthru
      _
    %v48 = vld [vmem:[%s0] sm:$0xf]
    %v49 = vld [vmem:[%s0 + $0x4] sm:$0xf]
    %v50 = vld [vmem:[%s0 + $0x8] sm:$0xf]
    %v51 = vld [vmem:[%s0 + $0xc] sm:$0xf]
    %v52 = vld [vmem:[%s0 + $0x10] sm:$0xf]
    %v53 = vld [vmem:[%s0 + $0x14] sm:$0xf]
    %v54 = vld [vmem:[%s0 + $0x18] sm:$0xf]
    %v55 = vld [vmem:[%s0 + $0x1c] sm:$0xf]
    %v56 = vld [vmem:[%s0 + $0x20] sm:$0xf]
    %v57 = vld [vmem:[%s0 + $0x24] sm:$0xf]
    %v58 = vld [vmem:[%s0 + $0x28] sm:$0xf]
    %v59 = vld [vmem:[%s0 + $0x2c] sm:$0xf]
    %v60 = vld [vmem:[%s0 + $0x30] sm:$0xf]
    %v61 = vld [vmem:[%s0 + $0x34] sm:$0xf]
    %v62 = vld [vmem:[%s0 + $0x38] sm:$0xf]
    %v63 = vld [vmem:[%s0 + $0x3c] sm:$0xf]
    %v64 = vld [vmem:[%s0 + $0x40] sm:$0xf]
    %v65 = vld [vmem:[%s0 + $0x44] sm:$0xf]
    %v66 = vld [vmem:[%s0 + $0x48] sm:$0xf]
    %v67 = vld [vmem:[%s0 + $0x4c] sm:$0xf]
    %v68 = vld [vmem:[%s0 + $0x50] sm:$0xf]
    %v69 = vld [vmem:[%s0 + $0x54] sm:$0xf]
    %v70 = vld [vmem:[%s0 + $0x58] sm:$0xf]
    %v71 = vld [vmem:[%s0 + $0x5c] sm:$0xf]
    %v72 = vld [vmem:[%s0 + $0x60] sm:$0xf]
    %v73 = vld [vmem:[%s0 + $0x64] sm:$0xf]
    %v74 = vld [vmem:[%s0 + $0x68] sm:$0xf]
    %v75 = vld [vmem:[%s0 + $0x6c] sm:$0xf]
    %v76 = vld [vmem:[%s0 + $0x70] sm:$0xf]
    %v77 = vld [vmem:[%s0 + $0x74] sm:$0xf]
    %v78 = vld [vmem:[%s0 + $0x78] sm:$0xf]
    %v79 = vld [vmem:[%s0 + $0x7c] sm:$0xf]
    %v80 = vunpack.c.l.bf16 %v48
    %v81 = vunpack.c.l.bf16 %v49
    %v82 = vunpack.c.l.bf16 %v50
    %v83 = vunpack.c.l.bf16 %v51
    %v84 = vunpack.c.l.bf16 %v52
    %v85 = vunpack.c.l.bf16 %v53
    %v86 = vunpack.c.l.bf16 %v54
    %v87 = vunpack.c.l.bf16 %v55
    %v88 = vunpack.c.l.bf16 %v56
    %v89 = vunpack.c.l.bf16 %v57
    %v90 = vunpack.c.l.bf16 %v58
    %v91 = vunpack.c.l.bf16 %v59
    %v92 = vunpack.c.l.bf16 %v60
    %v93 = vunpack.c.l.bf16 %v61
    %v94 = vunpack.c.l.bf16 %v62
    %v95 = vunpack.c.l.bf16 %v63
    %v96 = vunpack.c.l.bf16 %v64
    %v97 = vunpack.c.l.bf16 %v65
    %v98 = vunpack.c.l.bf16 %v66
    %v99 = vunpack.c.l.bf16 %v67
    %v100 = vunpack.c.l.bf16 %v68
    %v101 = vunpack.c.l.bf16 %v69
    %v102 = vunpack.c.l.bf16 %v70
    %v103 = vunpack.c.l.bf16 %v71
    %v104 = vunpack.c.l.bf16 %v72
    %v105 = vunpack.c.l.bf16 %v73
    %v106 = vunpack.c.l.bf16 %v74
    %v107 = vunpack.c.l.bf16 %v75
    %v108 = vunpack.c.l.bf16 %v76
    %v109 = vunpack.c.l.bf16 %v77
    %v110 = vunpack.c.l.bf16 %v78
    %v111 = vunpack.c.l.bf16 %v79
    %vm144 = vcmask 1046528
    %v145 = vrot.slane %v80, 1
    %v146 = vrot.slane %v81, 1
    %v147 = vsel %vm144, %v145, %v146
    %v148 = vrot.slane %v82, 1
    %v149 = vsel %vm144, %v146, %v148
    %v150 = vrot.slane %v83, 1
    %v151 = vsel %vm144, %v148, %v150
    %v152 = vrot.slane %v84, 1
    %v153 = vsel %vm144, %v150, %v152
    %v154 = vrot.slane %v85, 1
    %v155 = vsel %vm144, %v152, %v154
    %v156 = vrot.slane %v86, 1
    %v157 = vsel %vm144, %v154, %v156
    %v158 = vrot.slane %v87, 1
    %v159 = vsel %vm144, %v156, %v158
    %v160 = vrot.slane %v88, 1
    %v161 = vsel %vm144, %v158, %v160
    %v162 = vrot.slane %v89, 1
    %v163 = vsel %vm144, %v160, %v162
    %v164 = vrot.slane %v90, 1
    %v165 = vsel %vm144, %v162, %v164
    %v166 = vrot.slane %v91, 1
    %v167 = vsel %vm144, %v164, %v166
    %v168 = vrot.slane %v92, 1
    %v169 = vsel %vm144, %v166, %v168
    %v170 = vrot.slane %v93, 1
    %v171 = vsel %vm144, %v168, %v170
    %v172 = vrot.slane %v94, 1
    %v173 = vsel %vm144, %v170, %v172
    %v174 = vrot.slane %v95, 1
    %v175 = vsel %vm144, %v172, %v174
    %v176 = vrot.slane %v96, 1
    %v177 = vsel %vm144, %v174, %v176
    %v178 = vrot.slane %v97, 1
    %v179 = vsel %vm144, %v176, %v178
    %v180 = vrot.slane %v98, 1
    %v181 = vsel %vm144, %v178, %v180
    %v182 = vrot.slane %v99, 1
    %v183 = vsel %vm144, %v180, %v182
    %v184 = vrot.slane %v100, 1
    %v185 = vsel %vm144, %v182, %v184
    %v186 = vrot.slane %v101, 1
    %v187 = vsel %vm144, %v184, %v186
    %v188 = vrot.slane %v102, 1
    %v189 = vsel %vm144, %v186, %v188
    %v190 = vrot.slane %v103, 1
    %v191 = vsel %vm144, %v188, %v190
    %v192 = vrot.slane %v104, 1
    %v193 = vsel %vm144, %v190, %v192
    %v194 = vrot.slane %v105, 1
    %v195 = vsel %vm144, %v192, %v194
    %v196 = vrot.slane %v106, 1
    %v197 = vsel %vm144, %v194, %v196
    %v198 = vrot.slane %v107, 1
    %v199 = vsel %vm144, %v196, %v198
    %v200 = vrot.slane %v108, 1
    %v201 = vsel %vm144, %v198, %v200
    %v202 = vrot.slane %v109, 1
    %v203 = vsel %vm144, %v200, %v202
    %v204 = vrot.slane %v110, 1
    %v205 = vsel %vm144, %v202, %v204
    %v206 = vrot.slane %v111, 1
    %v207 = vsel %vm144, %v204, %v206
    %v210 = vsel %vm144, %v206, %v145
    %vm211 = vcmask 1045504
    %v212 = vrot.slane %v80, 2
    %v213 = vrot.slane %v81, 2
    %v214 = vsel %vm211, %v212, %v213
    %v215 = vrot.slane %v82, 2
    %v216 = vsel %vm211, %v213, %v215
    %v217 = vrot.slane %v83, 2
    %v218 = vsel %vm211, %v215, %v217
    %v219 = vrot.slane %v84, 2
    %v220 = vsel %vm211, %v217, %v219
    %v221 = vrot.slane %v85, 2
    %v222 = vsel %vm211, %v219, %v221
    %v223 = vrot.slane %v86, 2
    %v224 = vsel %vm211, %v221, %v223
    %v225 = vrot.slane %v87, 2
    %v226 = vsel %vm211, %v223, %v225
    %v227 = vrot.slane %v88, 2
    %v228 = vsel %vm211, %v225, %v227
    %v229 = vrot.slane %v89, 2
    %v230 = vsel %vm211, %v227, %v229
    %v231 = vrot.slane %v90, 2
    %v232 = vsel %vm211, %v229, %v231
    %v233 = vrot.slane %v91, 2
    %v234 = vsel %vm211, %v231, %v233
    %v235 = vrot.slane %v92, 2
    %v236 = vsel %vm211, %v233, %v235
    %v237 = vrot.slane %v93, 2
    %v238 = vsel %vm211, %v235, %v237
    %v239 = vrot.slane %v94, 2
    %v240 = vsel %vm211, %v237, %v239
    %v241 = vrot.slane %v95, 2
    %v242 = vsel %vm211, %v239, %v241
    %v243 = vrot.slane %v96, 2
    %v244 = vsel %vm211, %v241, %v243
    %v245 = vrot.slane %v97, 2
    %v246 = vsel %vm211, %v243, %v245
    %v247 = vrot.slane %v98, 2
    %v248 = vsel %vm211, %v245, %v247
    %v249 = vrot.slane %v99, 2
    %v250 = vsel %vm211, %v247, %v249
    %v251 = vrot.slane %v100, 2
    %v252 = vsel %vm211, %v249, %v251
    %v253 = vrot.slane %v101, 2
    %v254 = vsel %vm211, %v251, %v253
    %v255 = vrot.slane %v102, 2
    %v256 = vsel %vm211, %v253, %v255
    %v257 = vrot.slane %v103, 2
    %v258 = vsel %vm211, %v255, %v257
    %v259 = vrot.slane %v104, 2
    %v260 = vsel %vm211, %v257, %v259
    %v261 = vrot.slane %v105, 2
    %v262 = vsel %vm211, %v259, %v261
    %v263 = vrot.slane %v106, 2
    %v264 = vsel %vm211, %v261, %v263
    %v265 = vrot.slane %v107, 2
    %v266 = vsel %vm211, %v263, %v265
    %v267 = vrot.slane %v108, 2
    %v268 = vsel %vm211, %v265, %v267
    %v269 = vrot.slane %v109, 2
    %v270 = vsel %vm211, %v267, %v269
    %v271 = vrot.slane %v110, 2
    %v272 = vsel %vm211, %v269, %v271
    %v273 = vrot.slane %v111, 2
    %v274 = vsel %vm211, %v271, %v273
    %v277 = vsel %vm211, %v273, %v212
    %279 = vrot.lane.b32.xlu0 %v147, 4
    %v280 = vpop.permute.xlu0 %279
    %281 = vrot.lane.b32.xlu0 %v149, 4
    %v282 = vpop.permute.xlu0 %281
    %283 = vrot.lane.b32.xlu0 %v151, 4
    %v284 = vpop.permute.xlu0 %283
    %285 = vrot.lane.b32.xlu0 %v153, 4
    %v286 = vpop.permute.xlu0 %285
    %287 = vrot.lane.b32.xlu0 %v155, 4
    %v288 = vpop.permute.xlu0 %287
    %289 = vrot.lane.b32.xlu0 %v157, 4
    %v290 = vpop.permute.xlu0 %289
    %291 = vrot.lane.b32.xlu0 %v159, 4
    %v292 = vpop.permute.xlu0 %291
    %293 = vrot.lane.b32.xlu0 %v161, 4
    %v294 = vpop.permute.xlu0 %293
    %295 = vrot.lane.b32.xlu0 %v163, 4
    %v296 = vpop.permute.xlu0 %295
    %297 = vrot.lane.b32.xlu0 %v165, 4
    %v298 = vpop.permute.xlu0 %297
    %299 = vrot.lane.b32.xlu0 %v167, 4
    %v300 = vpop.permute.xlu0 %299
    %301 = vrot.lane.b32.xlu0 %v169, 4
    %v302 = vpop.permute.xlu0 %301
    %303 = vrot.lane.b32.xlu0 %v171, 4
    %v304 = vpop.permute.xlu0 %303
    %305 = vrot.lane.b32.xlu0 %v173, 4
    %v306 = vpop.permute.xlu0 %305
    %307 = vrot.lane.b32.xlu0 %v175, 4
    %v308 = vpop.permute.xlu0 %307
    %309 = vrot.lane.b32.xlu0 %v177, 4
    %v310 = vpop.permute.xlu0 %309
    %311 = vrot.lane.b32.xlu0 %v179, 4
    %v312 = vpop.permute.xlu0 %311
    %313 = vrot.lane.b32.xlu0 %v181, 4
    %v314 = vpop.permute.xlu0 %313
    %315 = vrot.lane.b32.xlu0 %v183, 4
    %v316 = vpop.permute.xlu0 %315
    %317 = vrot.lane.b32.xlu0 %v185, 4
    %v318 = vpop.permute.xlu0 %317
    %319 = vrot.lane.b32.xlu0 %v187, 4
    %v320 = vpop.permute.xlu0 %319
    %321 = vrot.lane.b32.xlu0 %v189, 4
    %v322 = vpop.permute.xlu0 %321
    %323 = vrot.lane.b32.xlu0 %v191, 4
    %v324 = vpop.permute.xlu0 %323
    %325 = vrot.lane.b32.xlu0 %v193, 4
    %v326 = vpop.permute.xlu0 %325
    %327 = vrot.lane.b32.xlu0 %v195, 4
    %v328 = vpop.permute.xlu0 %327
    %329 = vrot.lane.b32.xlu0 %v197, 4
    %v330 = vpop.permute.xlu0 %329
    %331 = vrot.lane.b32.xlu0 %v199, 4
    %v332 = vpop.permute.xlu0 %331
    %333 = vrot.lane.b32.xlu0 %v201, 4
    %v334 = vpop.permute.xlu0 %333
    %335 = vrot.lane.b32.xlu0 %v203, 4
    %v336 = vpop.permute.xlu0 %335
    %337 = vrot.lane.b32.xlu0 %v205, 4
    %v338 = vpop.permute.xlu0 %337
    %339 = vrot.lane.b32.xlu0 %v207, 4
    %v340 = vpop.permute.xlu0 %339
    %341 = vrot.lane.b32.xlu0 %v210, 4
    %v342 = vpop.permute.xlu0 %341
    %376 = vrot.lane.b32.xlu0 %v214, 8
    %v377 = vpop.permute.xlu0 %376
    %378 = vrot.lane.b32.xlu0 %v216, 8
    %v379 = vpop.permute.xlu0 %378
    %380 = vrot.lane.b32.xlu0 %v218, 8
    %v381 = vpop.permute.xlu0 %380
    %382 = vrot.lane.b32.xlu0 %v220, 8
    %v383 = vpop.permute.xlu0 %382
    %384 = vrot.lane.b32.xlu0 %v222, 8
    %v385 = vpop.permute.xlu0 %384
    %386 = vrot.lane.b32.xlu0 %v224, 8
    %v387 = vpop.permute.xlu0 %386
    %388 = vrot.lane.b32.xlu0 %v226, 8
    %v389 = vpop.permute.xlu0 %388
    %390 = vrot.lane.b32.xlu0 %v228, 8
    %v391 = vpop.permute.xlu0 %390
    %392 = vrot.lane.b32.xlu0 %v230, 8
    %v393 = vpop.permute.xlu0 %392
    %394 = vrot.lane.b32.xlu0 %v232, 8
    %v395 = vpop.permute.xlu0 %394
    %396 = vrot.lane.b32.xlu0 %v234, 8
    %v397 = vpop.permute.xlu0 %396
    %398 = vrot.lane.b32.xlu0 %v236, 8
    %v399 = vpop.permute.xlu0 %398
    %400 = vrot.lane.b32.xlu0 %v238, 8
    %v401 = vpop.permute.xlu0 %400
    %402 = vrot.lane.b32.xlu0 %v240, 8
    %v403 = vpop.permute.xlu0 %402
    %404 = vrot.lane.b32.xlu0 %v242, 8
    %v405 = vpop.permute.xlu0 %404
    %406 = vrot.lane.b32.xlu0 %v244, 8
    %v407 = vpop.permute.xlu0 %406
    %408 = vrot.lane.b32.xlu0 %v246, 8
    %v409 = vpop.permute.xlu0 %408
    %410 = vrot.lane.b32.xlu0 %v248, 8
    %v411 = vpop.permute.xlu0 %410
    %412 = vrot.lane.b32.xlu0 %v250, 8
    %v413 = vpop.permute.xlu0 %412
    %414 = vrot.lane.b32.xlu0 %v252, 8
    %v415 = vpop.permute.xlu0 %414
    %416 = vrot.lane.b32.xlu0 %v254, 8
    %v417 = vpop.permute.xlu0 %416
    %418 = vrot.lane.b32.xlu0 %v256, 8
    %v419 = vpop.permute.xlu0 %418
    %420 = vrot.lane.b32.xlu0 %v258, 8
    %v421 = vpop.permute.xlu0 %420
    %422 = vrot.lane.b32.xlu0 %v260, 8
    %v423 = vpop.permute.xlu0 %422
    %424 = vrot.lane.b32.xlu0 %v262, 8
    %v425 = vpop.permute.xlu0 %424
    %426 = vrot.lane.b32.xlu0 %v264, 8
    %v427 = vpop.permute.xlu0 %426
    %428 = vrot.lane.b32.xlu0 %v266, 8
    %v429 = vpop.permute.xlu0 %428
    %430 = vrot.lane.b32.xlu0 %v268, 8
    %v431 = vpop.permute.xlu0 %430
    %432 = vrot.lane.b32.xlu0 %v270, 8
    %v433 = vpop.permute.xlu0 %432
    %434 = vrot.lane.b32.xlu0 %v272, 8
    %v435 = vpop.permute.xlu0 %434
    %436 = vrot.lane.b32.xlu0 %v274, 8
    %v437 = vpop.permute.xlu0 %436
    %438 = vrot.lane.b32.xlu0 %v277, 8
    %v439 = vpop.permute.xlu0 %438
    %vm472 = vcmask 31744
    %v473 = vsel %vm472, %v80, %v280
    %v474 = vsel %vm472, %v81, %v282
    %v475 = vsel %vm472, %v82, %v284
    %v476 = vsel %vm472, %v83, %v286
    %v477 = vsel %vm472, %v84, %v288
    %v478 = vsel %vm472, %v85, %v290
    %v479 = vsel %vm472, %v86, %v292
    %v480 = vsel %vm472, %v87, %v294
    %v481 = vsel %vm472, %v88, %v296
    %v482 = vsel %vm472, %v89, %v298
    %v483 = vsel %vm472, %v90, %v300
    %v484 = vsel %vm472, %v91, %v302
    %v485 = vsel %vm472, %v92, %v304
    %v486 = vsel %vm472, %v93, %v306
    %v487 = vsel %vm472, %v94, %v308
    %v488 = vsel %vm472, %v95, %v310
    %v489 = vsel %vm472, %v96, %v312
    %v490 = vsel %vm472, %v97, %v314
    %v491 = vsel %vm472, %v98, %v316
    %v492 = vsel %vm472, %v99, %v318
    %v493 = vsel %vm472, %v100, %v320
    %v494 = vsel %vm472, %v101, %v322
    %v495 = vsel %vm472, %v102, %v324
    %v496 = vsel %vm472, %v103, %v326
    %v497 = vsel %vm472, %v104, %v328
    %v498 = vsel %vm472, %v105, %v330
    %v499 = vsel %vm472, %v106, %v332
    %v500 = vsel %vm472, %v107, %v334
    %v501 = vsel %vm472, %v108, %v336
    %v502 = vsel %vm472, %v109, %v338
    %v503 = vsel %vm472, %v110, %v340
    %v504 = vsel %vm472, %v111, %v342
    %vm505 = vcmask 64512
    %v506 = vsel %vm505, %v473, %v377
    %v507 = vsel %vm505, %v474, %v379
    %v508 = vsel %vm505, %v475, %v381
    %v509 = vsel %vm505, %v476, %v383
    %v510 = vsel %vm505, %v477, %v385
    %v511 = vsel %vm505, %v478, %v387
    %v512 = vsel %vm505, %v479, %v389
    %v513 = vsel %vm505, %v480, %v391
    %v514 = vsel %vm505, %v481, %v393
    %v515 = vsel %vm505, %v482, %v395
    %v516 = vsel %vm505, %v483, %v397
    %v517 = vsel %vm505, %v484, %v399
    %v518 = vsel %vm505, %v485, %v401
    %v519 = vsel %vm505, %v486, %v403
    %v520 = vsel %vm505, %v487, %v405
    %v521 = vsel %vm505, %v488, %v407
    %v522 = vsel %vm505, %v489, %v409
    %v523 = vsel %vm505, %v490, %v411
    %v524 = vsel %vm505, %v491, %v413
    %v525 = vsel %vm505, %v492, %v415
    %v526 = vsel %vm505, %v493, %v417
    %v527 = vsel %vm505, %v494, %v419
    %v528 = vsel %vm505, %v495, %v421
    %v529 = vsel %vm505, %v496, %v423
    %v530 = vsel %vm505, %v497, %v425
    %v531 = vsel %vm505, %v498, %v427
    %v532 = vsel %vm505, %v499, %v429
    %v533 = vsel %vm505, %v500, %v431
    %v534 = vsel %vm505, %v501, %v433
    %v535 = vsel %vm505, %v502, %v435
    %v536 = vsel %vm505, %v503, %v437
    %v537 = vsel %vm505, %v504, %v439
    %v538 = vpack.c.bf16 %v507, %v506
    %v539 = vpack.c.bf16 %v509, %v508
    %v540 = vpack.c.bf16 %v511, %v510
    %v541 = vpack.c.bf16 %v513, %v512
    %v542 = vpack.c.bf16 %v515, %v514
    %v543 = vpack.c.bf16 %v517, %v516
    %v544 = vpack.c.bf16 %v519, %v518
    %v545 = vpack.c.bf16 %v521, %v520
    %v546 = vpack.c.bf16 %v523, %v522
    %v547 = vpack.c.bf16 %v525, %v524
    %v548 = vpack.c.bf16 %v527, %v526
    %v549 = vpack.c.bf16 %v529, %v528
    %v550 = vpack.c.bf16 %v531, %v530
    %v551 = vpack.c.bf16 %v533, %v532
    %v552 = vpack.c.bf16 %v535, %v534
    %v553 = vpack.c.bf16 %v537, %v536
    %v554 = vld [vmem:[%s1] sm:$0xf]
    %v555 = vld [vmem:[%s1 + $0x4] sm:$0x3]
    %v558 = vunpack.c.l.b16 %v554
    %v559 = vunpack.c.l.b16 %v555
    %v560 = vpack.c.b16 %v559, %v558
    %vm561 = vcmask 97280
    %v563 = vsel %vm561, %v538, 0
    %v566 = vsel %vm561, %v539, 0
    %v569 = vsel %vm561, %v540, 0
    %v572 = vsel %vm561, %v541, 0
    %v575 = vsel %vm561, %v542, 0
    %v578 = vsel %vm561, %v543, 0
    %v581 = vsel %vm561, %v544, 0
    %v584 = vsel %vm561, %v545, 0
    %v587 = vsel %vm561, %v546, 0
    %v590 = vsel %vm561, %v547, 0
    %v593 = vsel %vm561, %v548, 0
    %v596 = vsel %vm561, %v549, 0
    %v599 = vsel %vm561, %v550, 0
    %v602 = vsel %vm561, %v551, 0
    %v605 = vsel %vm561, %v552, 0
    %v608 = vsel %vm561, %v553, 0
    %v611 = vsel %vm211, %v560, 0
    %613 = vmatprep.subr.bf16.mxu0 0
    %614 = vmatpush1.bf16.msra.mxu0 0
    %615 = vmatprep.subr.bf16.mxu0 0
    %616 = vmatpush1.bf16.msra.mxu0 0
    %617 = vmatprep.subr.bf16.mxu0 0
    %618 = vmatpush1.bf16.msra.mxu0 0
    %619 = vmatprep.subr.bf16.mxu0 0
    %620 = vmatpush1.bf16.msra.mxu0 0
    %621 = vmatprep.subr.bf16.mxu0 0
    %622 = vmatpush1.bf16.msra.mxu0 0
    %623 = vmatprep.subr.bf16.mxu0 0
    %624 = vmatpush1.bf16.msra.mxu0 0
    %625 = vmatprep.subr.bf16.mxu0 0
    %626 = vmatpush1.bf16.msra.mxu0 0
    %627 = vmatprep.subr.bf16.mxu0 0
    %628 = vmatpush1.bf16.msra.mxu0 %v611
    %629 = vmatprep.subr.bf16.mxu0 0
    %630 = vmatpush2.bf16.msra.mxu0 0
    %631 = vmatprep.subr.bf16.mxu0 0
    %632 = vmatpush2.bf16.msra.mxu0 0
    %633 = vmatprep.subr.bf16.mxu0 0
    %634 = vmatpush2.bf16.msra.mxu0 0
    %635 = vmatprep.subr.bf16.mxu0 0
    %636 = vmatpush2.bf16.msra.mxu0 0
    %637 = vmatprep.subr.bf16.mxu0 0
    %638 = vmatpush2.bf16.msra.mxu0 0
    %639 = vmatprep.subr.bf16.mxu0 0
    %640 = vmatpush2.bf16.msra.mxu0 0
    %641 = vmatprep.subr.bf16.mxu0 0
    %642 = vmatpush2.bf16.msra.mxu0 0
    %643 = vmatprep.subr.bf16.mxu0 0
    %644 = vmatpush2.bf16.msra.mxu0 0
    %645 = vmatprep.mubr.bf16.mxu0 0
    %646 = vmatmul.mubr.bf16.gmra.mxu0 %v563
    %v647 = vpop.f32.mrf.mxu0
    %v648 = vadd.f32 0.0, %v647
    %v649 = vpop.f32.mrf.mxu0
    %v650 = vpop.f32.mrf.mxu0
    %v651 = vadd.f32 0.0, %v650
    %v652 = vpop.f32.mrf.mxu0
    %653 = vmatprep.mubr.bf16.mxu0 0
    %654 = vmatmul.mubr.bf16.gmra.mxu0 %v566
    %v655 = vpop.f32.mrf.mxu0
    %v656 = vadd.f32 0.0, %v655
    %v657 = vpop.f32.mrf.mxu0
    %v658 = vpop.f32.mrf.mxu0
    %v659 = vadd.f32 0.0, %v658
    %v660 = vpop.f32.mrf.mxu0
    %661 = vmatprep.mubr.bf16.mxu0 0
    %662 = vmatmul.mubr.bf16.gmra.mxu0 %v569
    %v663 = vpop.f32.mrf.mxu0
    %v664 = vadd.f32 0.0, %v663
    %v665 = vpop.f32.mrf.mxu0
    %v666 = vpop.f32.mrf.mxu0
    %v667 = vadd.f32 0.0, %v666
    %v668 = vpop.f32.mrf.mxu0
    %669 = vmatprep.mubr.bf16.mxu0 0
    %670 = vmatmul.mubr.bf16.gmra.mxu0 %v572
    %v671 = vpop.f32.mrf.mxu0
    %v672 = vadd.f32 0.0, %v671
    %v673 = vpop.f32.mrf.mxu0
    %v674 = vpop.f32.mrf.mxu0
    %v675 = vadd.f32 0.0, %v674
    %v676 = vpop.f32.mrf.mxu0
    %677 = vmatprep.mubr.bf16.mxu0 0
    %678 = vmatmul.mubr.bf16.gmra.mxu0 %v575
    %v679 = vpop.f32.mrf.mxu0
    %v680 = vadd.f32 0.0, %v679
    %v681 = vpop.f32.mrf.mxu0
    %v682 = vpop.f32.mrf.mxu0
    %v683 = vadd.f32 0.0, %v682
    %v684 = vpop.f32.mrf.mxu0
    %685 = vmatprep.mubr.bf16.mxu0 0
    %686 = vmatmul.mubr.bf16.gmra.mxu0 %v578
    %v687 = vpop.f32.mrf.mxu0
    %v688 = vadd.f32 0.0, %v687
    %v689 = vpop.f32.mrf.mxu0
    %v690 = vpop.f32.mrf.mxu0
    %v691 = vadd.f32 0.0, %v690
    %v692 = vpop.f32.mrf.mxu0
    %693 = vmatprep.mubr.bf16.mxu0 0
    %694 = vmatmul.mubr.bf16.gmra.mxu0 %v581
    %v695 = vpop.f32.mrf.mxu0
    %v696 = vadd.f32 0.0, %v695
    %v697 = vpop.f32.mrf.mxu0
    %v698 = vpop.f32.mrf.mxu0
    %v699 = vadd.f32 0.0, %v698
    %v700 = vpop.f32.mrf.mxu0
    %701 = vmatprep.mubr.bf16.mxu0 0
    %702 = vmatmul.mubr.bf16.gmra.mxu0 %v584
    %v703 = vpop.f32.mrf.mxu0
    %v704 = vadd.f32 0.0, %v703
    %v705 = vpop.f32.mrf.mxu0
    %v706 = vpop.f32.mrf.mxu0
    %v707 = vadd.f32 0.0, %v706
    %v708 = vpop.f32.mrf.mxu0
    %709 = vmatprep.mubr.bf16.mxu0 0
    %710 = vmatmul.mubr.bf16.gmra.mxu0 %v587
    %v711 = vpop.f32.mrf.mxu0
    %v712 = vadd.f32 0.0, %v711
    %v713 = vpop.f32.mrf.mxu0
    %v714 = vpop.f32.mrf.mxu0
    %v715 = vadd.f32 0.0, %v714
    %v716 = vpop.f32.mrf.mxu0
    %717 = vmatprep.mubr.bf16.mxu0 0
    %718 = vmatmul.mubr.bf16.gmra.mxu0 %v590
    %v719 = vpop.f32.mrf.mxu0
    %v720 = vadd.f32 0.0, %v719
    %v721 = vpop.f32.mrf.mxu0
    %v722 = vpop.f32.mrf.mxu0
    %v723 = vadd.f32 0.0, %v722
    %v724 = vpop.f32.mrf.mxu0
    %725 = vmatprep.mubr.bf16.mxu0 0
    %726 = vmatmul.mubr.bf16.gmra.mxu0 %v593
    %v727 = vpop.f32.mrf.mxu0
    %v728 = vadd.f32 0.0, %v727
    %v729 = vpop.f32.mrf.mxu0
    %v730 = vpop.f32.mrf.mxu0
    %v731 = vadd.f32 0.0, %v730
    %v732 = vpop.f32.mrf.mxu0
    %733 = vmatprep.mubr.bf16.mxu0 0
    %734 = vmatmul.mubr.bf16.gmra.mxu0 %v596
    %v735 = vpop.f32.mrf.mxu0
    %v736 = vadd.f32 0.0, %v735
    %v737 = vpop.f32.mrf.mxu0
    %v738 = vpop.f32.mrf.mxu0
    %v739 = vadd.f32 0.0, %v738
    %v740 = vpop.f32.mrf.mxu0
    %741 = vmatprep.mubr.bf16.mxu0 0
    %742 = vmatmul.mubr.bf16.gmra.mxu0 %v599
    %v743 = vpop.f32.mrf.mxu0
    %v744 = vadd.f32 0.0, %v743
    %v745 = vpop.f32.mrf.mxu0
    %v746 = vpop.f32.mrf.mxu0
    %v747 = vadd.f32 0.0, %v746
    %v748 = vpop.f32.mrf.mxu0
    %749 = vmatprep.mubr.bf16.mxu0 0
    %750 = vmatmul.mubr.bf16.gmra.mxu0 %v602
    %v751 = vpop.f32.mrf.mxu0
    %v752 = vadd.f32 0.0, %v751
    %v753 = vpop.f32.mrf.mxu0
    %v754 = vpop.f32.mrf.mxu0
    %v755 = vadd.f32 0.0, %v754
    %v756 = vpop.f32.mrf.mxu0
    %757 = vmatprep.mubr.bf16.mxu0 0
    %758 = vmatmul.mubr.bf16.gmra.mxu0 %v605
    %v759 = vpop.f32.mrf.mxu0
    %v760 = vadd.f32 0.0, %v759
    %v761 = vpop.f32.mrf.mxu0
    %v762 = vpop.f32.mrf.mxu0
    %v763 = vadd.f32 0.0, %v762
    %v764 = vpop.f32.mrf.mxu0
    %765 = vmatprep.mubr.bf16.mxu0 0
    %766 = vmatmul.mubr.bf16.gmra.mxu0 %v608
    %v767 = vpop.f32.mrf.mxu0
    %v768 = vadd.f32 0.0, %v767
    %v769 = vpop.f32.mrf.mxu0
    %v770 = vpop.f32.mrf.mxu0
    %v771 = vadd.f32 0.0, %v770
    %v772 = vpop.f32.mrf.mxu0
    %773 = vdwg.mxu0
    %vm774 = vcmask 261120
    %775 = vst.msk [vmem:[#allocation2] sm:$0xff] %vm774, %v648
    %776 = vst.msk [vmem:[#allocation2 + $0x8] sm:$0xff] %vm774, %v651
    %777 = vst.msk [vmem:[#allocation2 + $0x10] sm:$0xff] %vm774, %v656
    %778 = vst.msk [vmem:[#allocation2 + $0x18] sm:$0xff] %vm774, %v659
    %779 = vst.msk [vmem:[#allocation2 + $0x20] sm:$0xff] %vm774, %v664
    %780 = vst.msk [vmem:[#allocation2 + $0x28] sm:$0xff] %vm774, %v667
    %781 = vst.msk [vmem:[#allocation2 + $0x30] sm:$0xff] %vm774, %v672
    %782 = vst.msk [vmem:[#allocation2 + $0x38] sm:$0xff] %vm774, %v675
    %783 = vst.msk [vmem:[#allocation2 + $0x40] sm:$0xff] %vm774, %v680
    %784 = vst.msk [vmem:[#allocation2 + $0x48] sm:$0xff] %vm774, %v683
    %785 = vst.msk [vmem:[#allocation2 + $0x50] sm:$0xff] %vm774, %v688
    %786 = vst.msk [vmem:[#allocation2 + $0x58] sm:$0xff] %vm774, %v691
    %787 = vst.msk [vmem:[#allocation2 + $0x60] sm:$0xff] %vm774, %v696
    %788 = vst.msk [vmem:[#allocation2 + $0x68] sm:$0xff] %vm774, %v699
    %789 = vst.msk [vmem:[#allocation2 + $0x70] sm:$0xff] %vm774, %v704
    %790 = vst.msk [vmem:[#allocation2 + $0x78] sm:$0xff] %vm774, %v707
    %791 = vst.msk [vmem:[#allocation2 + $0x80] sm:$0xff] %vm774, %v712
    %792 = vst.msk [vmem:[#allocation2 + $0x88] sm:$0xff] %vm774, %v715
    %793 = vst.msk [vmem:[#allocation2 + $0x90] sm:$0xff] %vm774, %v720
    %794 = vst.msk [vmem:[#allocation2 + $0x98] sm:$0xff] %vm774, %v723
    %795 = vst.msk [vmem:[#allocation2 + $0xa0] sm:$0xff] %vm774, %v728
    %796 = vst.msk [vmem:[#allocation2 + $0xa8] sm:$0xff] %vm774, %v731
    %797 = vst.msk [vmem:[#allocation2 + $0xb0] sm:$0xff] %vm774, %v736
    %798 = vst.msk [vmem:[#allocation2 + $0xb8] sm:$0xff] %vm774, %v739
    %799 = vst.msk [vmem:[#allocation2 + $0xc0] sm:$0xff] %vm774, %v744
    %800 = vst.msk [vmem:[#allocation2 + $0xc8] sm:$0xff] %vm774, %v747
    %801 = vst.msk [vmem:[#allocation2 + $0xd0] sm:$0xff] %vm774, %v752
    %802 = vst.msk [vmem:[#allocation2 + $0xd8] sm:$0xff] %vm774, %v755
    %803 = vst.msk [vmem:[#allocation2 + $0xe0] sm:$0xff] %vm774, %v760
    %804 = vst.msk [vmem:[#allocation2 + $0xe8] sm:$0xff] %vm774, %v763
    %805 = vst.msk [vmem:[#allocation2 + $0xf0] sm:$0xff] %vm774, %v768
    %806 = vst.msk [vmem:[#allocation2 + $0xf8] sm:$0xff] %vm774, %v771
    %v807 = vld [vmem:[#allocation2] ss:$2 sm:$0xff]
    %s808 = scalar_lea.vmem [#allocation2], 16
    %v809 = vld [vmem:[%s808] ss:$2 sm:$0xff]
    %s810 = scalar_lea.vmem [#allocation2], 32
    %v811 = vld [vmem:[%s810] ss:$2 sm:$0xff]
    %s812 = scalar_lea.vmem [#allocation2], 48
    %v813 = vld [vmem:[%s812] ss:$2 sm:$0xff]
    %s814 = scalar_lea.vmem [#allocation2], 64
    %v815 = vld [vmem:[%s814] ss:$2 sm:$0xff]
    %s816 = scalar_lea.vmem [#allocation2], 80
    %v817 = vld [vmem:[%s816] ss:$2 sm:$0xff]
    %s818 = scalar_lea.vmem [#allocation2], 96
    %v819 = vld [vmem:[%s818] ss:$2 sm:$0xff]
    %s820 = scalar_lea.vmem [#allocation2], 112
    %v821 = vld [vmem:[%s820] ss:$2 sm:$0xff]
    %s822 = scalar_lea.vmem [#allocation2], 128
    %v823 = vld [vmem:[%s822] ss:$2 sm:$0xff]
    %s824 = scalar_lea.vmem [#allocation2], 144
    %v825 = vld [vmem:[%s824] ss:$2 sm:$0xff]
    %s826 = scalar_lea.vmem [#allocation2], 160
    %v827 = vld [vmem:[%s826] ss:$2 sm:$0xff]
    %s828 = scalar_lea.vmem [#allocation2], 176
    %v829 = vld [vmem:[%s828] ss:$2 sm:$0xff]
    %s830 = scalar_lea.vmem [#allocation2], 192
    %v831 = vld [vmem:[%s830] ss:$2 sm:$0xff]
    %s832 = scalar_lea.vmem [#allocation2], 208
    %v833 = vld [vmem:[%s832] ss:$2 sm:$0xff]
    %s834 = scalar_lea.vmem [#allocation2], 224
    %v835 = vld [vmem:[%s834] ss:$2 sm:$0xff]
    %s836 = scalar_lea.vmem [#allocation2], 240
    %v837 = vld [vmem:[%s836] ss:$2 sm:$0xff]
    %s838 = scalar_lea.vmem [#allocation2], 1
    %v839 = vld [vmem:[%s838] ss:$2 sm:$0xff]
    %s840 = scalar_lea.vmem [#allocation2], 17
    %v841 = vld [vmem:[%s840] ss:$2 sm:$0xff]
    %s842 = scalar_lea.vmem [#allocation2], 33
    %v843 = vld [vmem:[%s842] ss:$2 sm:$0xff]
    %s844 = scalar_lea.vmem [#allocation2], 49
    %v845 = vld [vmem:[%s844] ss:$2 sm:$0xff]
    %s846 = scalar_lea.vmem [#allocation2], 65
    %v847 = vld [vmem:[%s846] ss:$2 sm:$0xff]
    %s848 = scalar_lea.vmem [#allocation2], 81
    %v849 = vld [vmem:[%s848] ss:$2 sm:$0xff]
    %s850 = scalar_lea.vmem [#allocation2], 97
    %v851 = vld [vmem:[%s850] ss:$2 sm:$0xff]
    %s852 = scalar_lea.vmem [#allocation2], 113
    %v853 = vld [vmem:[%s852] ss:$2 sm:$0xff]
    %s854 = scalar_lea.vmem [#allocation2], 129
    %v855 = vld [vmem:[%s854] ss:$2 sm:$0xff]
    %s856 = scalar_lea.vmem [#allocation2], 145
    %v857 = vld [vmem:[%s856] ss:$2 sm:$0xff]
    %s858 = scalar_lea.vmem [#allocation2], 161
    %v859 = vld [vmem:[%s858] ss:$2 sm:$0xff]
    %s860 = scalar_lea.vmem [#allocation2], 177
    %v861 = vld [vmem:[%s860] ss:$2 sm:$0xff]
    %s862 = scalar_lea.vmem [#allocation2], 193
    %v863 = vld [vmem:[%s862] ss:$2 sm:$0xff]
    %s864 = scalar_lea.vmem [#allocation2], 209
    %v865 = vld [vmem:[%s864] ss:$2 sm:$0xff]
    %s866 = scalar_lea.vmem [#allocation2], 225
    %v867 = vld [vmem:[%s866] ss:$2 sm:$0xff]
    %s868 = scalar_lea.vmem [#allocation2], 241
    %v869 = vld [vmem:[%s868] ss:$2 sm:$0xff]
    %v870 = vmax.f32 %v807, %v839
    %v871 = vmax.f32 %v809, %v841
    %v872 = vmax.f32 %v811, %v843
    %v873 = vmax.f32 %v813, %v845
    %v874 = vmax.f32 %v815, %v847
    %v875 = vmax.f32 %v817, %v849
    %v876 = vmax.f32 %v819, %v851
    %v877 = vmax.f32 %v821, %v853
    %v878 = vmax.f32 %v823, %v855
    %v879 = vmax.f32 %v825, %v857
    %v880 = vmax.f32 %v827, %v859
    %v881 = vmax.f32 %v829, %v861
    %v882 = vmax.f32 %v831, %v863
    %v883 = vmax.f32 %v833, %v865
    %v884 = vmax.f32 %v835, %v867
    %v885 = vmax.f32 %v837, %v869
    %v886 = vld [vmem:[%s2] sm:$0x1]
    %v888 = vlaneseq
    %v889 = vshrl.u32 %v888, 7
    %v890 = vsub.s32 0, %v889
    %v891 = vrot.slane %v886, %v890
    %v893 = vadd.f32 %v870, %v891
    %v894 = vadd.f32 %v871, %v891
    %v895 = vadd.f32 %v872, %v891
    %v896 = vadd.f32 %v873, %v891
    %v897 = vadd.f32 %v874, %v891
    %v898 = vadd.f32 %v875, %v891
    %v899 = vadd.f32 %v876, %v891
    %v900 = vadd.f32 %v877, %v891
    %v901 = vadd.f32 %v878, %v891
    %v902 = vadd.f32 %v879, %v891
    %v903 = vadd.f32 %v880, %v891
    %v904 = vadd.f32 %v881, %v891
    %v905 = vadd.f32 %v882, %v891
    %v906 = vadd.f32 %v883, %v891
    %v907 = vadd.f32 %v884, %v891
    %v908 = vadd.f32 %v885, %v891
    %v909 = vmax.f32 %v893, 0.0
    %v910 = vmax.f32 %v894, 0.0
    %v911 = vmax.f32 %v895, 0.0
    %v912 = vmax.f32 %v896, 0.0
    %v913 = vmax.f32 %v897, 0.0
    %v914 = vmax.f32 %v898, 0.0
    %v915 = vmax.f32 %v899, 0.0
    %v916 = vmax.f32 %v900, 0.0
    %v917 = vmax.f32 %v901, 0.0
    %v918 = vmax.f32 %v902, 0.0
    %v919 = vmax.f32 %v903, 0.0
    %v920 = vmax.f32 %v904, 0.0
    %v921 = vmax.f32 %v905, 0.0
    %v922 = vmax.f32 %v906, 0.0
    %v923 = vmax.f32 %v907, 0.0
    %v924 = vmax.f32 %v908, 0.0
    %v941 = vrot.slane %v909, 1
    %v942 = vrot.slane %v910, 1
    %v943 = vsel %vm144, %v941, %v942
    %v944 = vrot.slane %v911, 1
    %v945 = vsel %vm144, %v942, %v944
    %v946 = vrot.slane %v912, 1
    %v947 = vsel %vm144, %v944, %v946
    %v948 = vrot.slane %v913, 1
    %v949 = vsel %vm144, %v946, %v948
    %v950 = vrot.slane %v914, 1
    %v951 = vsel %vm144, %v948, %v950
    %v952 = vrot.slane %v915, 1
    %v953 = vsel %vm144, %v950, %v952
    %v954 = vrot.slane %v916, 1
    %v955 = vsel %vm144, %v952, %v954
    %v956 = vrot.slane %v917, 1
    %v957 = vsel %vm144, %v954, %v956
    %v958 = vrot.slane %v918, 1
    %v959 = vsel %vm144, %v956, %v958
    %v960 = vrot.slane %v919, 1
    %v961 = vsel %vm144, %v958, %v960
    %v962 = vrot.slane %v920, 1
    %v963 = vsel %vm144, %v960, %v962
    %v964 = vrot.slane %v921, 1
    %v965 = vsel %vm144, %v962, %v964
    %v966 = vrot.slane %v922, 1
    %v967 = vsel %vm144, %v964, %v966
    %v968 = vrot.slane %v923, 1
    %v969 = vsel %vm144, %v966, %v968
    %v970 = vrot.slane %v924, 1
    %v971 = vsel %vm144, %v968, %v970
    %v974 = vsel %vm144, %v970, %v941
    %v975 = vrot.slane %v909, 2
    %v976 = vrot.slane %v910, 2
    %v977 = vsel %vm211, %v975, %v976
    %v978 = vrot.slane %v911, 2
    %v979 = vsel %vm211, %v976, %v978
    %v980 = vrot.slane %v912, 2
    %v981 = vsel %vm211, %v978, %v980
    %v982 = vrot.slane %v913, 2
    %v983 = vsel %vm211, %v980, %v982
    %v984 = vrot.slane %v914, 2
    %v985 = vsel %vm211, %v982, %v984
    %v986 = vrot.slane %v915, 2
    %v987 = vsel %vm211, %v984, %v986
    %v988 = vrot.slane %v916, 2
    %v989 = vsel %vm211, %v986, %v988
    %v990 = vrot.slane %v917, 2
    %v991 = vsel %vm211, %v988, %v990
    %v992 = vrot.slane %v918, 2
    %v993 = vsel %vm211, %v990, %v992
    %v994 = vrot.slane %v919, 2
    %v995 = vsel %vm211, %v992, %v994
    %v996 = vrot.slane %v920, 2
    %v997 = vsel %vm211, %v994, %v996
    %v998 = vrot.slane %v921, 2
    %v999 = vsel %vm211, %v996, %v998
    %v1000 = vrot.slane %v922, 2
    %v1001 = vsel %vm211, %v998, %v1000
    %v1002 = vrot.slane %v923, 2
    %v1003 = vsel %vm211, %v1000, %v1002
    %v1004 = vrot.slane %v924, 2
    %v1005 = vsel %vm211, %v1002, %v1004
    %v1008 = vsel %vm211, %v1004, %v975
    %1010 = vrot.lane.b32.xlu0 %v943, 32
    %v1011 = vpop.permute.xlu0 %1010
    %1012 = vrot.lane.b32.xlu0 %v945, 32
    %v1013 = vpop.permute.xlu0 %1012
    %1014 = vrot.lane.b32.xlu0 %v947, 32
    %v1015 = vpop.permute.xlu0 %1014
    %1016 = vrot.lane.b32.xlu0 %v949, 32
    %v1017 = vpop.permute.xlu0 %1016
    %1018 = vrot.lane.b32.xlu0 %v951, 32
    %v1019 = vpop.permute.xlu0 %1018
    %1020 = vrot.lane.b32.xlu0 %v953, 32
    %v1021 = vpop.permute.xlu0 %1020
    %1022 = vrot.lane.b32.xlu0 %v955, 32
    %v1023 = vpop.permute.xlu0 %1022
    %1024 = vrot.lane.b32.xlu0 %v957, 32
    %v1025 = vpop.permute.xlu0 %1024
    %1026 = vrot.lane.b32.xlu0 %v959, 32
    %v1027 = vpop.permute.xlu0 %1026
    %1028 = vrot.lane.b32.xlu0 %v961, 32
    %v1029 = vpop.permute.xlu0 %1028
    %1030 = vrot.lane.b32.xlu0 %v963, 32
    %v1031 = vpop.permute.xlu0 %1030
    %1032 = vrot.lane.b32.xlu0 %v965, 32
    %v1033 = vpop.permute.xlu0 %1032
    %1034 = vrot.lane.b32.xlu0 %v967, 32
    %v1035 = vpop.permute.xlu0 %1034
    %1036 = vrot.lane.b32.xlu0 %v969, 32
    %v1037 = vpop.permute.xlu0 %1036
    %1038 = vrot.lane.b32.xlu0 %v971, 32
    %v1039 = vpop.permute.xlu0 %1038
    %1040 = vrot.lane.b32.xlu0 %v974, 32
    %v1041 = vpop.permute.xlu0 %1040
    %1059 = vrot.lane.b32.xlu0 %v977, 64
    %v1060 = vpop.permute.xlu0 %1059
    %1061 = vrot.lane.b32.xlu0 %v979, 64
    %v1062 = vpop.permute.xlu0 %1061
    %1063 = vrot.lane.b32.xlu0 %v981, 64
    %v1064 = vpop.permute.xlu0 %1063
    %1065 = vrot.lane.b32.xlu0 %v983, 64
    %v1066 = vpop.permute.xlu0 %1065
    %1067 = vrot.lane.b32.xlu0 %v985, 64
    %v1068 = vpop.permute.xlu0 %1067
    %1069 = vrot.lane.b32.xlu0 %v987, 64
    %v1070 = vpop.permute.xlu0 %1069
    %1071 = vrot.lane.b32.xlu0 %v989, 64
    %v1072 = vpop.permute.xlu0 %1071
    %1073 = vrot.lane.b32.xlu0 %v991, 64
    %v1074 = vpop.permute.xlu0 %1073
    %1075 = vrot.lane.b32.xlu0 %v993, 64
    %v1076 = vpop.permute.xlu0 %1075
    %1077 = vrot.lane.b32.xlu0 %v995, 64
    %v1078 = vpop.permute.xlu0 %1077
    %1079 = vrot.lane.b32.xlu0 %v997, 64
    %v1080 = vpop.permute.xlu0 %1079
    %1081 = vrot.lane.b32.xlu0 %v999, 64
    %v1082 = vpop.permute.xlu0 %1081
    %1083 = vrot.lane.b32.xlu0 %v1001, 64
    %v1084 = vpop.permute.xlu0 %1083
    %1085 = vrot.lane.b32.xlu0 %v1003, 64
    %v1086 = vpop.permute.xlu0 %1085
    %1087 = vrot.lane.b32.xlu0 %v1005, 64
    %v1088 = vpop.permute.xlu0 %1087
    %1089 = vrot.lane.b32.xlu0 %v1008, 64
    %v1090 = vpop.permute.xlu0 %1089
    %v1107 = vsel %vm774, %v909, %v1011
    %v1108 = vsel %vm774, %v910, %v1013
    %v1109 = vsel %vm774, %v911, %v1015
    %v1110 = vsel %vm774, %v912, %v1017
    %v1111 = vsel %vm774, %v913, %v1019
    %v1112 = vsel %vm774, %v914, %v1021
    %v1113 = vsel %vm774, %v915, %v1023
    %v1114 = vsel %vm774, %v916, %v1025
    %v1115 = vsel %vm774, %v917, %v1027
    %v1116 = vsel %vm774, %v918, %v1029
    %v1117 = vsel %vm774, %v919, %v1031
    %v1118 = vsel %vm774, %v920, %v1033
    %v1119 = vsel %vm774, %v921, %v1035
    %v1120 = vsel %vm774, %v922, %v1037
    %v1121 = vsel %vm774, %v923, %v1039
    %v1122 = vsel %vm774, %v924, %v1041
    %vm1123 = vcmask 523264
    %v1124 = vsel %vm1123, %v1107, %v1060
    %v1125 = vsel %vm1123, %v1108, %v1062
    %v1126 = vsel %vm1123, %v1109, %v1064
    %v1127 = vsel %vm1123, %v1110, %v1066
    %v1128 = vsel %vm1123, %v1111, %v1068
    %v1129 = vsel %vm1123, %v1112, %v1070
    %v1130 = vsel %vm1123, %v1113, %v1072
    %v1131 = vsel %vm1123, %v1114, %v1074
    %v1132 = vsel %vm1123, %v1115, %v1076
    %v1133 = vsel %vm1123, %v1116, %v1078
    %v1134 = vsel %vm1123, %v1117, %v1080
    %v1135 = vsel %vm1123, %v1118, %v1082
    %v1136 = vsel %vm1123, %v1119, %v1084
    %v1137 = vsel %vm1123, %v1120, %v1086
    %v1138 = vsel %vm1123, %v1121, %v1088
    %v1139 = vsel %vm1123, %v1122, %v1090
    %v1140 = vpack.c.bf16 %v1125, %v1124
    %v1141 = vpack.c.bf16 %v1127, %v1126
    %v1142 = vpack.c.bf16 %v1129, %v1128
    %v1143 = vpack.c.bf16 %v1131, %v1130
    %v1144 = vpack.c.bf16 %v1133, %v1132
    %v1145 = vpack.c.bf16 %v1135, %v1134
    %v1146 = vpack.c.bf16 %v1137, %v1136
    %v1147 = vpack.c.bf16 %v1139, %v1138
    %v1148 = vld [vmem:[%s3] sm:$0xf]
    %v1149 = vld [vmem:[%s3 + $0x4] sm:$0xf]
    %v1150 = vld [vmem:[%s3 + $0x8] sm:$0xf]
    %v1151 = vld [vmem:[%s3 + $0xc] sm:$0xf]
    %v1152 = vld [vmem:[%s3 + $0x10] sm:$0xf]
    %v1153 = vld [vmem:[%s3 + $0x14] sm:$0xf]
    %v1154 = vld [vmem:[%s3 + $0x18] sm:$0xf]
    %v1155 = vld [vmem:[%s3 + $0x1c] sm:$0xf]
    %v1156 = vld [vmem:[%s3 + $0x20] sm:$0xf]
    %v1157 = vld [vmem:[%s3 + $0x24] sm:$0xf]
    %v1158 = vld [vmem:[%s3 + $0x28] sm:$0xf]
    %v1159 = vld [vmem:[%s3 + $0x2c] sm:$0xf]
    %v1172 = vunpack.c.l.b16 %v1148
    %v1173 = vunpack.c.l.b16 %v1149
    %v1174 = vunpack.c.l.b16 %v1150
    %v1175 = vunpack.c.l.b16 %v1151
    %v1176 = vunpack.c.l.b16 %v1152
    %v1177 = vunpack.c.l.b16 %v1153
    %v1178 = vunpack.c.l.b16 %v1154
    %v1179 = vunpack.c.l.b16 %v1155
    %v1180 = vunpack.c.l.b16 %v1156
    %v1181 = vunpack.c.l.b16 %v1157
    %v1182 = vunpack.c.l.b16 %v1158
    %v1183 = vunpack.c.l.b16 %v1159
    %v1184 = vpack.c.b16 %v1173, %v1172
    %v1185 = vpack.c.b16 %v1175, %v1174
    %v1186 = vpack.c.b16 %v1177, %v1176
    %v1187 = vpack.c.b16 %v1179, %v1178
    %v1188 = vpack.c.b16 %v1181, %v1180
    %v1189 = vpack.c.b16 %v1183, %v1182
    %vm1196 = vcmask 785408
    %v1198 = vsel %vm1196, %v1140, 0
    %v1201 = vsel %vm1196, %v1141, 0
    %v1204 = vsel %vm1196, %v1142, 0
    %v1207 = vsel %vm1196, %v1143, 0
    %v1210 = vsel %vm1196, %v1144, 0
    %v1213 = vsel %vm1196, %v1145, 0
    %v1216 = vsel %vm1196, %v1146, 0
    %v1219 = vsel %vm1196, %v1147, 0
    %1221 = vmatprep.subr.bf16.mxu0 0
    %1222 = vmatpush1.bf16.msra.mxu0 0
    %1223 = vmatprep.subr.bf16.mxu0 0
    %1224 = vmatpush1.bf16.msra.mxu0 0
    %1225 = vmatprep.subr.bf16.mxu0 0
    %1226 = vmatpush1.bf16.msra.mxu0 %v1189
    %1227 = vmatprep.subr.bf16.mxu0 0
    %1228 = vmatpush1.bf16.msra.mxu0 %v1188
    %1229 = vmatprep.subr.bf16.mxu0 0
    %1230 = vmatpush1.bf16.msra.mxu0 %v1187
    %1231 = vmatprep.subr.bf16.mxu0 0
    %1232 = vmatpush1.bf16.msra.mxu0 %v1186
    %1233 = vmatprep.subr.bf16.mxu0 0
    %1234 = vmatpush1.bf16.msra.mxu0 %v1185
    %1235 = vmatprep.subr.bf16.mxu0 0
    %1236 = vmatpush1.bf16.msra.mxu0 %v1184
    %1237 = vmatprep.subr.bf16.mxu0 0
    %1238 = vmatpush2.bf16.msra.mxu0 0
    %1239 = vmatprep.subr.bf16.mxu0 0
    %1240 = vmatpush2.bf16.msra.mxu0 0
    %1241 = vmatprep.subr.bf16.mxu0 0
    %1242 = vmatpush2.bf16.msra.mxu0 0
    %1243 = vmatprep.subr.bf16.mxu0 0
    %1244 = vmatpush2.bf16.msra.mxu0 0
    %1245 = vmatprep.subr.bf16.mxu0 0
    %1246 = vmatpush2.bf16.msra.mxu0 0
    %1247 = vmatprep.subr.bf16.mxu0 0
    %1248 = vmatpush2.bf16.msra.mxu0 0
    %1249 = vmatprep.subr.bf16.mxu0 0
    %1250 = vmatpush2.bf16.msra.mxu0 0
    %1251 = vmatprep.subr.bf16.mxu0 0
    %1252 = vmatpush2.bf16.msra.mxu0 0
    %1253 = vmatprep.mubr.bf16.mxu0 0
    %1254 = vmatmul.mubr.bf16.gmra.mxu0 %v1198
    %v1255 = vpop.f32.mrf.mxu0
    %v1256 = vadd.f32 0.0, %v1255
    %v1257 = vpop.f32.mrf.mxu0
    %v1258 = vpop.f32.mrf.mxu0
    %v1259 = vadd.f32 0.0, %v1258
    %v1260 = vpop.f32.mrf.mxu0
    %1261 = vmatprep.mubr.bf16.mxu0 0
    %1262 = vmatmul.mubr.bf16.gmra.mxu0 %v1201
    %v1263 = vpop.f32.mrf.mxu0
    %v1264 = vadd.f32 0.0, %v1263
    %v1265 = vpop.f32.mrf.mxu0
    %v1266 = vpop.f32.mrf.mxu0
    %v1267 = vadd.f32 0.0, %v1266
    %v1268 = vpop.f32.mrf.mxu0
    %1269 = vmatprep.mubr.bf16.mxu0 0
    %1270 = vmatmul.mubr.bf16.gmra.mxu0 %v1204
    %v1271 = vpop.f32.mrf.mxu0
    %v1272 = vadd.f32 0.0, %v1271
    %v1273 = vpop.f32.mrf.mxu0
    %v1274 = vpop.f32.mrf.mxu0
    %v1275 = vadd.f32 0.0, %v1274
    %v1276 = vpop.f32.mrf.mxu0
    %1277 = vmatprep.mubr.bf16.mxu0 0
    %1278 = vmatmul.mubr.bf16.gmra.mxu0 %v1207
    %v1279 = vpop.f32.mrf.mxu0
    %v1280 = vadd.f32 0.0, %v1279
    %v1281 = vpop.f32.mrf.mxu0
    %v1282 = vpop.f32.mrf.mxu0
    %v1283 = vadd.f32 0.0, %v1282
    %v1284 = vpop.f32.mrf.mxu0
    %1285 = vmatprep.mubr.bf16.mxu0 0
    %1286 = vmatmul.mubr.bf16.gmra.mxu0 %v1210
    %v1287 = vpop.f32.mrf.mxu0
    %v1288 = vadd.f32 0.0, %v1287
    %v1289 = vpop.f32.mrf.mxu0
    %v1290 = vpop.f32.mrf.mxu0
    %v1291 = vadd.f32 0.0, %v1290
    %v1292 = vpop.f32.mrf.mxu0
    %1293 = vmatprep.mubr.bf16.mxu0 0
    %1294 = vmatmul.mubr.bf16.gmra.mxu0 %v1213
    %v1295 = vpop.f32.mrf.mxu0
    %v1296 = vadd.f32 0.0, %v1295
    %v1297 = vpop.f32.mrf.mxu0
    %v1298 = vpop.f32.mrf.mxu0
    %v1299 = vadd.f32 0.0, %v1298
    %v1300 = vpop.f32.mrf.mxu0
    %1301 = vmatprep.mubr.bf16.mxu0 0
    %1302 = vmatmul.mubr.bf16.gmra.mxu0 %v1216
    %v1303 = vpop.f32.mrf.mxu0
    %v1304 = vadd.f32 0.0, %v1303
    %v1305 = vpop.f32.mrf.mxu0
    %v1306 = vpop.f32.mrf.mxu0
    %v1307 = vadd.f32 0.0, %v1306
    %v1308 = vpop.f32.mrf.mxu0
    %1309 = vmatprep.mubr.bf16.mxu0 0
    %1310 = vmatmul.mubr.bf16.gmra.mxu0 %v1219
    %v1311 = vpop.f32.mrf.mxu0
    %v1312 = vadd.f32 0.0, %v1311
    %v1313 = vpop.f32.mrf.mxu0
    %v1314 = vpop.f32.mrf.mxu0
    %v1315 = vadd.f32 0.0, %v1314
    %v1316 = vpop.f32.mrf.mxu0
    %1317 = vdwg.mxu0
    %1318 = vst.msk [vmem:[#allocation3] sm:$0xff] %vm1123, %v1256
    %1319 = vst.msk [vmem:[#allocation3 + $0x8] sm:$0xff] %vm1123, %v1259
    %1320 = vst.msk [vmem:[#allocation3 + $0x10] sm:$0xff] %vm1123, %v1264
    %1321 = vst.msk [vmem:[#allocation3 + $0x18] sm:$0xff] %vm1123, %v1267
    %1322 = vst.msk [vmem:[#allocation3 + $0x20] sm:$0xff] %vm1123, %v1272
    %1323 = vst.msk [vmem:[#allocation3 + $0x28] sm:$0xff] %vm1123, %v1275
    %1324 = vst.msk [vmem:[#allocation3 + $0x30] sm:$0xff] %vm1123, %v1280
    %1325 = vst.msk [vmem:[#allocation3 + $0x38] sm:$0xff] %vm1123, %v1283
    %1326 = vst.msk [vmem:[#allocation3 + $0x40] sm:$0xff] %vm1123, %v1288
    %1327 = vst.msk [vmem:[#allocation3 + $0x48] sm:$0xff] %vm1123, %v1291
    %1328 = vst.msk [vmem:[#allocation3 + $0x50] sm:$0xff] %vm1123, %v1296
    %1329 = vst.msk [vmem:[#allocation3 + $0x58] sm:$0xff] %vm1123, %v1299
    %1330 = vst.msk [vmem:[#allocation3 + $0x60] sm:$0xff] %vm1123, %v1304
    %1331 = vst.msk [vmem:[#allocation3 + $0x68] sm:$0xff] %vm1123, %v1307
    %1332 = vst.msk [vmem:[#allocation3 + $0x70] sm:$0xff] %vm1123, %v1312
    %1333 = vst.msk [vmem:[#allocation3 + $0x78] sm:$0xff] %vm1123, %v1315
    %v1334 = vld [vmem:[#allocation3] ss:$2 sm:$0xff]
    %s1335 = scalar_lea.vmem [#allocation3], 16
    %v1336 = vld [vmem:[%s1335] ss:$2 sm:$0xff]
    %s1337 = scalar_lea.vmem [#allocation3], 32
    %v1338 = vld [vmem:[%s1337] ss:$2 sm:$0xff]
    %s1339 = scalar_lea.vmem [#allocation3], 48
    %v1340 = vld [vmem:[%s1339] ss:$2 sm:$0xff]
    %s1341 = scalar_lea.vmem [#allocation3], 64
    %v1342 = vld [vmem:[%s1341] ss:$2 sm:$0xff]
    %s1343 = scalar_lea.vmem [#allocation3], 80
    %v1344 = vld [vmem:[%s1343] ss:$2 sm:$0xff]
    %s1345 = scalar_lea.vmem [#allocation3], 96
    %v1346 = vld [vmem:[%s1345] ss:$2 sm:$0xff]
    %s1347 = scalar_lea.vmem [#allocation3], 112
    %v1348 = vld [vmem:[%s1347] ss:$2 sm:$0xff]
    %s1349 = scalar_lea.vmem [#allocation3], 1
    %v1350 = vld [vmem:[%s1349] ss:$2 sm:$0xff]
    %s1351 = scalar_lea.vmem [#allocation3], 17
    %v1352 = vld [vmem:[%s1351] ss:$2 sm:$0xff]
    %s1353 = scalar_lea.vmem [#allocation3], 33
    %v1354 = vld [vmem:[%s1353] ss:$2 sm:$0xff]
    %s1355 = scalar_lea.vmem [#allocation3], 49
    %v1356 = vld [vmem:[%s1355] ss:$2 sm:$0xff]
    %s1357 = scalar_lea.vmem [#allocation3], 65
    %v1358 = vld [vmem:[%s1357] ss:$2 sm:$0xff]
    %s1359 = scalar_lea.vmem [#allocation3], 81
    %v1360 = vld [vmem:[%s1359] ss:$2 sm:$0xff]
    %s1361 = scalar_lea.vmem [#allocation3], 97
    %v1362 = vld [vmem:[%s1361] ss:$2 sm:$0xff]
    %s1363 = scalar_lea.vmem [#allocation3], 113
    %v1364 = vld [vmem:[%s1363] ss:$2 sm:$0xff]
    %v1365 = vmax.f32 %v1334, %v1350
    %v1366 = vmax.f32 %v1336, %v1352
    %v1367 = vmax.f32 %v1338, %v1354
    %v1368 = vmax.f32 %v1340, %v1356
    %v1369 = vmax.f32 %v1342, %v1358
    %v1370 = vmax.f32 %v1344, %v1360
    %v1371 = vmax.f32 %v1346, %v1362
    %v1372 = vmax.f32 %v1348, %v1364
    %v1373 = vld [vmem:[%s4] sm:$0x1]
    %v1375 = vlaneseq
    %v1376 = vshrl.u32 %v1375, 7
    %v1377 = vsub.s32 0, %v1376
    %v1378 = vrot.slane %v1373, %v1377
    %v1380 = vadd.f32 %v1365, %v1378
    %v1381 = vadd.f32 %v1366, %v1378
    %v1382 = vadd.f32 %v1367, %v1378
    %v1383 = vadd.f32 %v1368, %v1378
    %v1384 = vadd.f32 %v1369, %v1378
    %v1385 = vadd.f32 %v1370, %v1378
    %v1386 = vadd.f32 %v1371, %v1378
    %v1387 = vadd.f32 %v1372, %v1378
    %v1388 = vmax.f32 %v1380, 0.0
    %v1389 = vmax.f32 %v1381, 0.0
    %v1390 = vmax.f32 %v1382, 0.0
    %v1391 = vmax.f32 %v1383, 0.0
    %v1392 = vmax.f32 %v1384, 0.0
    %v1393 = vmax.f32 %v1385, 0.0
    %v1394 = vmax.f32 %v1386, 0.0
    %v1395 = vmax.f32 %v1387, 0.0
    %1396 = vst.msk [vmem:[#allocation4] sm:$0xff] %vm1123, %v1388
    %1397 = vst.msk [vmem:[#allocation4 + $0x8] sm:$0xff] %vm1123, %v1389
    %1398 = vst.msk [vmem:[#allocation4 + $0x10] sm:$0xff] %vm1123, %v1390
    %1399 = vst.msk [vmem:[#allocation4 + $0x18] sm:$0xff] %vm1123, %v1391
    %1400 = vst.msk [vmem:[#allocation4 + $0x20] sm:$0xff] %vm1123, %v1392
    %1401 = vst.msk [vmem:[#allocation4 + $0x28] sm:$0xff] %vm1123, %v1393
    %1402 = vst.msk [vmem:[#allocation4 + $0x30] sm:$0xff] %vm1123, %v1394
    %1403 = vst.msk [vmem:[#allocation4 + $0x38] sm:$0xff] %vm1123, %v1395
    %v1404 = vld [vmem:[#allocation4] ss:$8 sm:$0xf]
    %v1405 = vld [vmem:[#allocation4] ss:$8 sm:$0xf0]
    %v1406 = vor.u32 %v1404, %v1405
    %v1407 = vpack.c.bf16 %v1406, %v1406
    %v1408 = vld [vmem:[%s5] sm:$0xf]
    %v1409 = vld [vmem:[%s5 + $0x4] sm:$0xf]
    %v1410 = vld [vmem:[%s5 + $0x8] sm:$0xf]
    %v1411 = vld [vmem:[%s5 + $0xc] sm:$0xf]
    %v1412 = vld [vmem:[%s5 + $0x10] sm:$0xf]
    %v1413 = vld [vmem:[%s5 + $0x14] sm:$0xf]
    %v1414 = vld [vmem:[%s5 + $0x18] sm:$0xf]
    %v1415 = vld [vmem:[%s5 + $0x1c] sm:$0xf]
    %s1416 = scalar_lea.vmem [#allocation4], 1
    %v1417 = vld [vmem:[%s1416] ss:$8 sm:$0xf]
    %v1418 = vld [vmem:[%s1416] ss:$8 sm:$0xf0]
    %v1419 = vor.u32 %v1417, %v1418
    %v1420 = vpack.c.bf16 %v1419, %v1419
    %s1421 = scalar_lea.vmem %s5, 32
    %v1422 = vld [vmem:[%s1421] sm:$0xf]
    %v1423 = vld [vmem:[%s1421 + $0x4] sm:$0xf]
    %v1424 = vld [vmem:[%s1421 + $0x8] sm:$0xf]
    %v1425 = vld [vmem:[%s1421 + $0xc] sm:$0xf]
    %v1426 = vld [vmem:[%s1421 + $0x10] sm:$0xf]
    %v1427 = vld [vmem:[%s1421 + $0x14] sm:$0xf]
    %v1428 = vld [vmem:[%s1421 + $0x18] sm:$0xf]
    %v1429 = vld [vmem:[%s1421 + $0x1c] sm:$0xf]
    %v1438 = vunpack.c.l.b16 %v1422
    %v1439 = vunpack.c.l.b16 %v1423
    %v1440 = vunpack.c.l.b16 %v1424
    %v1441 = vunpack.c.l.b16 %v1425
    %v1442 = vunpack.c.l.b16 %v1426
    %v1443 = vunpack.c.l.b16 %v1427
    %v1444 = vunpack.c.l.b16 %v1428
    %v1445 = vunpack.c.l.b16 %v1429
    %v1446 = vpack.c.b16 %v1439, %v1438
    %v1447 = vpack.c.b16 %v1441, %v1440
    %v1448 = vpack.c.b16 %v1443, %v1442
    %v1449 = vpack.c.b16 %v1445, %v1444
    %v1455 = vsel %vm1123, %v1420, 0
    %1457 = vmatprep.subr.bf16.mxu0 0
    %1458 = vmatpush1.bf16.msra.mxu0 0
    %1459 = vmatprep.subr.bf16.mxu0 0
    %1460 = vmatpush1.bf16.msra.mxu0 0
    %1461 = vmatprep.subr.bf16.mxu0 0
    %1462 = vmatpush1.bf16.msra.mxu0 0
    %1463 = vmatprep.subr.bf16.mxu0 0
    %1464 = vmatpush1.bf16.msra.mxu0 0
    %1465 = vmatprep.subr.bf16.mxu0 0
    %1466 = vmatpush1.bf16.msra.mxu0 %v1449
    %1467 = vmatprep.subr.bf16.mxu0 0
    %1468 = vmatpush1.bf16.msra.mxu0 %v1448
    %1469 = vmatprep.subr.bf16.mxu0 0
    %1470 = vmatpush1.bf16.msra.mxu0 %v1447
    %1471 = vmatprep.subr.bf16.mxu0 0
    %1472 = vmatpush1.bf16.msra.mxu0 %v1446
    %1473 = vmatprep.subr.bf16.mxu0 0
    %1474 = vmatpush2.bf16.msra.mxu0 0
    %1475 = vmatprep.subr.bf16.mxu0 0
    %1476 = vmatpush2.bf16.msra.mxu0 0
    %1477 = vmatprep.subr.bf16.mxu0 0
    %1478 = vmatpush2.bf16.msra.mxu0 0
    %1479 = vmatprep.subr.bf16.mxu0 0
    %1480 = vmatpush2.bf16.msra.mxu0 0
    %1481 = vmatprep.subr.bf16.mxu0 0
    %1482 = vmatpush2.bf16.msra.mxu0 0
    %1483 = vmatprep.subr.bf16.mxu0 0
    %1484 = vmatpush2.bf16.msra.mxu0 0
    %1485 = vmatprep.subr.bf16.mxu0 0
    %1486 = vmatpush2.bf16.msra.mxu0 0
    %1487 = vmatprep.subr.bf16.mxu0 0
    %1488 = vmatpush2.bf16.msra.mxu0 0
    %1489 = vmatprep.mubr.bf16.mxu0 0
    %1490 = vmatmul.mubr.bf16.gmra.mxu0 %v1455
    %v1491 = vpop.f32.mrf.mxu0
    %v1492 = vadd.f32 0.0, %v1491
    %v1493 = vpop.f32.mrf.mxu0
    %v1494 = vpop.f32.mrf.mxu0
    %v1495 = vpop.f32.mrf.mxu0
    %1496 = vdwg.mxu0
    %v1505 = vunpack.c.l.b16 %v1408
    %v1506 = vunpack.c.l.b16 %v1409
    %v1507 = vunpack.c.l.b16 %v1410
    %v1508 = vunpack.c.l.b16 %v1411
    %v1509 = vunpack.c.l.b16 %v1412
    %v1510 = vunpack.c.l.b16 %v1413
    %v1511 = vunpack.c.l.b16 %v1414
    %v1512 = vunpack.c.l.b16 %v1415
    %v1513 = vpack.c.b16 %v1506, %v1505
    %v1514 = vpack.c.b16 %v1508, %v1507
    %v1515 = vpack.c.b16 %v1510, %v1509
    %v1516 = vpack.c.b16 %v1512, %v1511
    %v1522 = vsel %vm1123, %v1407, 0
    %1524 = vmatprep.subr.bf16.mxu0 0
    %1525 = vmatpush1.bf16.msra.mxu0 0
    %1526 = vmatprep.subr.bf16.mxu0 0
    %1527 = vmatpush1.bf16.msra.mxu0 0
    %1528 = vmatprep.subr.bf16.mxu0 0
    %1529 = vmatpush1.bf16.msra.mxu0 0
    %1530 = vmatprep.subr.bf16.mxu0 0
    %1531 = vmatpush1.bf16.msra.mxu0 0
    %1532 = vmatprep.subr.bf16.mxu0 0
    %1533 = vmatpush1.bf16.msra.mxu0 %v1516
    %1534 = vmatprep.subr.bf16.mxu0 0
    %1535 = vmatpush1.bf16.msra.mxu0 %v1515
    %1536 = vmatprep.subr.bf16.mxu0 0
    %1537 = vmatpush1.bf16.msra.mxu0 %v1514
    %1538 = vmatprep.subr.bf16.mxu0 0
    %1539 = vmatpush1.bf16.msra.mxu0 %v1513
    %1540 = vmatprep.subr.bf16.mxu0 0
    %1541 = vmatpush2.bf16.msra.mxu0 0
    %1542 = vmatprep.subr.bf16.mxu0 0
    %1543 = vmatpush2.bf16.msra.mxu0 0
    %1544 = vmatprep.subr.bf16.mxu0 0
    %1545 = vmatpush2.bf16.msra.mxu0 0
    %1546 = vmatprep.subr.bf16.mxu0 0
    %1547 = vmatpush2.bf16.msra.mxu0 0
    %1548 = vmatprep.subr.bf16.mxu0 0
    %1549 = vmatpush2.bf16.msra.mxu0 0
    %1550 = vmatprep.subr.bf16.mxu0 0
    %1551 = vmatpush2.bf16.msra.mxu0 0
    %1552 = vmatprep.subr.bf16.mxu0 0
    %1553 = vmatpush2.bf16.msra.mxu0 0
    %1554 = vmatprep.subr.bf16.mxu0 0
    %1555 = vmatpush2.bf16.msra.mxu0 0
    %1556 = vmatprep.mubr.bf16.mxu0 0
    %1557 = vmatmul.mubr.bf16.gmra.mxu0 %v1522
    %v1558 = vpop.f32.mrf.mxu0
    %v1559 = vadd.f32 %v1492, %v1558
    %v1560 = vpop.f32.mrf.mxu0
    %v1561 = vpop.f32.mrf.mxu0
    %v1562 = vpop.f32.mrf.mxu0
    %1563 = vdwg.mxu0
    %s1564 = scalar_lea.vmem [#allocation4], 2
    %v1565 = vld [vmem:[%s1564] ss:$8 sm:$0xf]
    %v1566 = vld [vmem:[%s1564] ss:$8 sm:$0xf0]
    %v1567 = vor.u32 %v1565, %v1566
    %v1568 = vpack.c.bf16 %v1567, %v1567
    %s1569 = scalar_lea.vmem %s5, 64
    %v1570 = vld [vmem:[%s1569] sm:$0xf]
    %v1571 = vld [vmem:[%s1569 + $0x4] sm:$0xf]
    %v1572 = vld [vmem:[%s1569 + $0x8] sm:$0xf]
    %v1573 = vld [vmem:[%s1569 + $0xc] sm:$0xf]
    %v1574 = vld [vmem:[%s1569 + $0x10] sm:$0xf]
    %v1575 = vld [vmem:[%s1569 + $0x14] sm:$0xf]
    %v1576 = vld [vmem:[%s1569 + $0x18] sm:$0xf]
    %v1577 = vld [vmem:[%s1569 + $0x1c] sm:$0xf]
    %v1586 = vunpack.c.l.b16 %v1570
    %v1587 = vunpack.c.l.b16 %v1571
    %v1588 = vunpack.c.l.b16 %v1572
    %v1589 = vunpack.c.l.b16 %v1573
    %v1590 = vunpack.c.l.b16 %v1574
    %v1591 = vunpack.c.l.b16 %v1575
    %v1592 = vunpack.c.l.b16 %v1576
    %v1593 = vunpack.c.l.b16 %v1577
    %v1594 = vpack.c.b16 %v1587, %v1586
    %v1595 = vpack.c.b16 %v1589, %v1588
    %v1596 = vpack.c.b16 %v1591, %v1590
    %v1597 = vpack.c.b16 %v1593, %v1592
    %v1603 = vsel %vm1123, %v1568, 0
    %1605 = vmatprep.subr.bf16.mxu0 0
    %1606 = vmatpush1.bf16.msra.mxu0 0
    %1607 = vmatprep.subr.bf16.mxu0 0
    %1608 = vmatpush1.bf16.msra.mxu0 0
    %1609 = vmatprep.subr.bf16.mxu0 0
    %1610 = vmatpush1.bf16.msra.mxu0 0
    %1611 = vmatprep.subr.bf16.mxu0 0
    %1612 = vmatpush1.bf16.msra.mxu0 0
    %1613 = vmatprep.subr.bf16.mxu0 0
    %1614 = vmatpush1.bf16.msra.mxu0 %v1597
    %1615 = vmatprep.subr.bf16.mxu0 0
    %1616 = vmatpush1.bf16.msra.mxu0 %v1596
    %1617 = vmatprep.subr.bf16.mxu0 0
    %1618 = vmatpush1.bf16.msra.mxu0 %v1595
    %1619 = vmatprep.subr.bf16.mxu0 0
    %1620 = vmatpush1.bf16.msra.mxu0 %v1594
    %1621 = vmatprep.subr.bf16.mxu0 0
    %1622 = vmatpush2.bf16.msra.mxu0 0
    %1623 = vmatprep.subr.bf16.mxu0 0
    %1624 = vmatpush2.bf16.msra.mxu0 0
    %1625 = vmatprep.subr.bf16.mxu0 0
    %1626 = vmatpush2.bf16.msra.mxu0 0
    %1627 = vmatprep.subr.bf16.mxu0 0
    %1628 = vmatpush2.bf16.msra.mxu0 0
    %1629 = vmatprep.subr.bf16.mxu0 0
    %1630 = vmatpush2.bf16.msra.mxu0 0
    %1631 = vmatprep.subr.bf16.mxu0 0
    %1632 = vmatpush2.bf16.msra.mxu0 0
    %1633 = vmatprep.subr.bf16.mxu0 0
    %1634 = vmatpush2.bf16.msra.mxu0 0
    %1635 = vmatprep.subr.bf16.mxu0 0
    %1636 = vmatpush2.bf16.msra.mxu0 0
    %1637 = vmatprep.mubr.bf16.mxu0 0
    %1638 = vmatmul.mubr.bf16.gmra.mxu0 %v1603
    %v1639 = vpop.f32.mrf.mxu0
    %v1640 = vadd.f32 0.0, %v1639
    %v1641 = vpop.f32.mrf.mxu0
    %v1642 = vpop.f32.mrf.mxu0
    %v1643 = vpop.f32.mrf.mxu0
    %1644 = vdwg.mxu0
    %v1645 = vadd.f32 %v1559, %v1640
    %s1646 = scalar_lea.vmem [#allocation4], 3
    %v1647 = vld [vmem:[%s1646] ss:$8 sm:$0xf]
    %v1648 = vld [vmem:[%s1646] ss:$8 sm:$0xf0]
    %v1649 = vor.u32 %v1647, %v1648
    %v1650 = vpack.c.bf16 %v1649, %v1649
    %s1651 = scalar_lea.vmem %s5, 96
    %v1652 = vld [vmem:[%s1651] sm:$0xf]
    %v1653 = vld [vmem:[%s1651 + $0x4] sm:$0xf]
    %v1654 = vld [vmem:[%s1651 + $0x8] sm:$0xf]
    %v1655 = vld [vmem:[%s1651 + $0xc] sm:$0xf]
    %v1656 = vld [vmem:[%s1651 + $0x10] sm:$0xf]
    %v1657 = vld [vmem:[%s1651 + $0x14] sm:$0xf]
    %v1658 = vld [vmem:[%s1651 + $0x18] sm:$0xf]
    %v1659 = vld [vmem:[%s1651 + $0x1c] sm:$0xf]
    %v1668 = vunpack.c.l.b16 %v1652
    %v1669 = vunpack.c.l.b16 %v1653
    %v1670 = vunpack.c.l.b16 %v1654
    %v1671 = vunpack.c.l.b16 %v1655
    %v1672 = vunpack.c.l.b16 %v1656
    %v1673 = vunpack.c.l.b16 %v1657
    %v1674 = vunpack.c.l.b16 %v1658
    %v1675 = vunpack.c.l.b16 %v1659
    %v1676 = vpack.c.b16 %v1669, %v1668
    %v1677 = vpack.c.b16 %v1671, %v1670
    %v1678 = vpack.c.b16 %v1673, %v1672
    %v1679 = vpack.c.b16 %v1675, %v1674
    %v1685 = vsel %vm1123, %v1650, 0
    %1687 = vmatprep.subr.bf16.mxu0 0
    %1688 = vmatpush1.bf16.msra.mxu0 0
    %1689 = vmatprep.subr.bf16.mxu0 0
    %1690 = vmatpush1.bf16.msra.mxu0 0
    %1691 = vmatprep.subr.bf16.mxu0 0
    %1692 = vmatpush1.bf16.msra.mxu0 0
    %1693 = vmatprep.subr.bf16.mxu0 0
    %1694 = vmatpush1.bf16.msra.mxu0 0
    %1695 = vmatprep.subr.bf16.mxu0 0
    %1696 = vmatpush1.bf16.msra.mxu0 %v1679
    %1697 = vmatprep.subr.bf16.mxu0 0
    %1698 = vmatpush1.bf16.msra.mxu0 %v1678
    %1699 = vmatprep.subr.bf16.mxu0 0
    %1700 = vmatpush1.bf16.msra.mxu0 %v1677
    %1701 = vmatprep.subr.bf16.mxu0 0
    %1702 = vmatpush1.bf16.msra.mxu0 %v1676
    %1703 = vmatprep.subr.bf16.mxu0 0
    %1704 = vmatpush2.bf16.msra.mxu0 0
    %1705 = vmatprep.subr.bf16.mxu0 0
    %1706 = vmatpush2.bf16.msra.mxu0 0
    %1707 = vmatprep.subr.bf16.mxu0 0
    %1708 = vmatpush2.bf16.msra.mxu0 0
    %1709 = vmatprep.subr.bf16.mxu0 0
    %1710 = vmatpush2.bf16.msra.mxu0 0
    %1711 = vmatprep.subr.bf16.mxu0 0
    %1712 = vmatpush2.bf16.msra.mxu0 0
    %1713 = vmatprep.subr.bf16.mxu0 0
    %1714 = vmatpush2.bf16.msra.mxu0 0
    %1715 = vmatprep.subr.bf16.mxu0 0
    %1716 = vmatpush2.bf16.msra.mxu0 0
    %1717 = vmatprep.subr.bf16.mxu0 0
    %1718 = vmatpush2.bf16.msra.mxu0 0
    %1719 = vmatprep.mubr.bf16.mxu0 0
    %1720 = vmatmul.mubr.bf16.gmra.mxu0 %v1685
    %v1721 = vpop.f32.mrf.mxu0
    %v1722 = vadd.f32 0.0, %v1721
    %v1723 = vpop.f32.mrf.mxu0
    %v1724 = vpop.f32.mrf.mxu0
    %v1725 = vpop.f32.mrf.mxu0
    %1726 = vdwg.mxu0
    %v1727 = vadd.f32 %v1645, %v1722
    %s1728 = scalar_lea.vmem [#allocation4], 4
    %v1729 = vld [vmem:[%s1728] ss:$8 sm:$0xf]
    %v1730 = vld [vmem:[%s1728] ss:$8 sm:$0xf0]
    %v1731 = vor.u32 %v1729, %v1730
    %v1732 = vpack.c.bf16 %v1731, %v1731
    %s1733 = scalar_lea.vmem %s5, 128
    %v1734 = vld [vmem:[%s1733] sm:$0xf]
    %v1735 = vld [vmem:[%s1733 + $0x4] sm:$0xf]
    %v1736 = vld [vmem:[%s1733 + $0x8] sm:$0xf]
    %v1737 = vld [vmem:[%s1733 + $0xc] sm:$0xf]
    %v1738 = vld [vmem:[%s1733 + $0x10] sm:$0xf]
    %v1739 = vld [vmem:[%s1733 + $0x14] sm:$0xf]
    %v1740 = vld [vmem:[%s1733 + $0x18] sm:$0xf]
    %v1741 = vld [vmem:[%s1733 + $0x1c] sm:$0xf]
    %v1750 = vunpack.c.l.b16 %v1734
    %v1751 = vunpack.c.l.b16 %v1735
    %v1752 = vunpack.c.l.b16 %v1736
    %v1753 = vunpack.c.l.b16 %v1737
    %v1754 = vunpack.c.l.b16 %v1738
    %v1755 = vunpack.c.l.b16 %v1739
    %v1756 = vunpack.c.l.b16 %v1740
    %v1757 = vunpack.c.l.b16 %v1741
    %v1758 = vpack.c.b16 %v1751, %v1750
    %v1759 = vpack.c.b16 %v1753, %v1752
    %v1760 = vpack.c.b16 %v1755, %v1754
    %v1761 = vpack.c.b16 %v1757, %v1756
    %v1767 = vsel %vm1123, %v1732, 0
    %1769 = vmatprep.subr.bf16.mxu0 0
    %1770 = vmatpush1.bf16.msra.mxu0 0
    %1771 = vmatprep.subr.bf16.mxu0 0
    %1772 = vmatpush1.bf16.msra.mxu0 0
    %1773 = vmatprep.subr.bf16.mxu0 0
    %1774 = vmatpush1.bf16.msra.mxu0 0
    %1775 = vmatprep.subr.bf16.mxu0 0
    %1776 = vmatpush1.bf16.msra.mxu0 0
    %1777 = vmatprep.subr.bf16.mxu0 0
    %1778 = vmatpush1.bf16.msra.mxu0 %v1761
    %1779 = vmatprep.subr.bf16.mxu0 0
    %1780 = vmatpush1.bf16.msra.mxu0 %v1760
    %1781 = vmatprep.subr.bf16.mxu0 0
    %1782 = vmatpush1.bf16.msra.mxu0 %v1759
    %1783 = vmatprep.subr.bf16.mxu0 0
    %1784 = vmatpush1.bf16.msra.mxu0 %v1758
    %1785 = vmatprep.subr.bf16.mxu0 0
    %1786 = vmatpush2.bf16.msra.mxu0 0
    %1787 = vmatprep.subr.bf16.mxu0 0
    %1788 = vmatpush2.bf16.msra.mxu0 0
    %1789 = vmatprep.subr.bf16.mxu0 0
    %1790 = vmatpush2.bf16.msra.mxu0 0
    %1791 = vmatprep.subr.bf16.mxu0 0
    %1792 = vmatpush2.bf16.msra.mxu0 0
    %1793 = vmatprep.subr.bf16.mxu0 0
    %1794 = vmatpush2.bf16.msra.mxu0 0
    %1795 = vmatprep.subr.bf16.mxu0 0
    %1796 = vmatpush2.bf16.msra.mxu0 0
    %1797 = vmatprep.subr.bf16.mxu0 0
    %1798 = vmatpush2.bf16.msra.mxu0 0
    %1799 = vmatprep.subr.bf16.mxu0 0
    %1800 = vmatpush2.bf16.msra.mxu0 0
    %1801 = vmatprep.mubr.bf16.mxu0 0
    %1802 = vmatmul.mubr.bf16.gmra.mxu0 %v1767
    %v1803 = vpop.f32.mrf.mxu0
    %v1804 = vadd.f32 0.0, %v1803
    %v1805 = vpop.f32.mrf.mxu0
    %v1806 = vpop.f32.mrf.mxu0
    %v1807 = vpop.f32.mrf.mxu0
    %1808 = vdwg.mxu0
    %v1809 = vadd.f32 %v1727, %v1804
    %s1810 = scalar_lea.vmem [#allocation4], 5
    %v1811 = vld [vmem:[%s1810] ss:$8 sm:$0xf]
    %v1812 = vld [vmem:[%s1810] ss:$8 sm:$0xf0]
    %v1813 = vor.u32 %v1811, %v1812
    %v1814 = vpack.c.bf16 %v1813, %v1813
    %s1815 = scalar_lea.vmem %s5, 160
    %v1816 = vld [vmem:[%s1815] sm:$0xf]
    %v1817 = vld [vmem:[%s1815 + $0x4] sm:$0xf]
    %v1818 = vld [vmem:[%s1815 + $0x8] sm:$0xf]
    %v1819 = vld [vmem:[%s1815 + $0xc] sm:$0xf]
    %v1820 = vld [vmem:[%s1815 + $0x10] sm:$0xf]
    %v1821 = vld [vmem:[%s1815 + $0x14] sm:$0xf]
    %v1822 = vld [vmem:[%s1815 + $0x18] sm:$0xf]
    %v1823 = vld [vmem:[%s1815 + $0x1c] sm:$0xf]
    %v1832 = vunpack.c.l.b16 %v1816
    %v1833 = vunpack.c.l.b16 %v1817
    %v1834 = vunpack.c.l.b16 %v1818
    %v1835 = vunpack.c.l.b16 %v1819
    %v1836 = vunpack.c.l.b16 %v1820
    %v1837 = vunpack.c.l.b16 %v1821
    %v1838 = vunpack.c.l.b16 %v1822
    %v1839 = vunpack.c.l.b16 %v1823
    %v1840 = vpack.c.b16 %v1833, %v1832
    %v1841 = vpack.c.b16 %v1835, %v1834
    %v1842 = vpack.c.b16 %v1837, %v1836
    %v1843 = vpack.c.b16 %v1839, %v1838
    %v1849 = vsel %vm1123, %v1814, 0
    %1851 = vmatprep.subr.bf16.mxu0 0
    %1852 = vmatpush1.bf16.msra.mxu0 0
    %1853 = vmatprep.subr.bf16.mxu0 0
    %1854 = vmatpush1.bf16.msra.mxu0 0
    %1855 = vmatprep.subr.bf16.mxu0 0
    %1856 = vmatpush1.bf16.msra.mxu0 0
    %1857 = vmatprep.subr.bf16.mxu0 0
    %1858 = vmatpush1.bf16.msra.mxu0 0
    %1859 = vmatprep.subr.bf16.mxu0 0
    %1860 = vmatpush1.bf16.msra.mxu0 %v1843
    %1861 = vmatprep.subr.bf16.mxu0 0
    %1862 = vmatpush1.bf16.msra.mxu0 %v1842
    %1863 = vmatprep.subr.bf16.mxu0 0
    %1864 = vmatpush1.bf16.msra.mxu0 %v1841
    %1865 = vmatprep.subr.bf16.mxu0 0
    %1866 = vmatpush1.bf16.msra.mxu0 %v1840
    %1867 = vmatprep.subr.bf16.mxu0 0
    %1868 = vmatpush2.bf16.msra.mxu0 0
    %1869 = vmatprep.subr.bf16.mxu0 0
    %1870 = vmatpush2.bf16.msra.mxu0 0
    %1871 = vmatprep.subr.bf16.mxu0 0
    %1872 = vmatpush2.bf16.msra.mxu0 0
    %1873 = vmatprep.subr.bf16.mxu0 0
    %1874 = vmatpush2.bf16.msra.mxu0 0
    %1875 = vmatprep.subr.bf16.mxu0 0
    %1876 = vmatpush2.bf16.msra.mxu0 0
    %1877 = vmatprep.subr.bf16.mxu0 0
    %1878 = vmatpush2.bf16.msra.mxu0 0
    %1879 = vmatprep.subr.bf16.mxu0 0
    %1880 = vmatpush2.bf16.msra.mxu0 0
    %1881 = vmatprep.subr.bf16.mxu0 0
    %1882 = vmatpush2.bf16.msra.mxu0 0
    %1883 = vmatprep.mubr.bf16.mxu0 0
    %1884 = vmatmul.mubr.bf16.gmra.mxu0 %v1849
    %v1885 = vpop.f32.mrf.mxu0
    %v1886 = vadd.f32 0.0, %v1885
    %v1887 = vpop.f32.mrf.mxu0
    %v1888 = vpop.f32.mrf.mxu0
    %v1889 = vpop.f32.mrf.mxu0
    %1890 = vdwg.mxu0
    %v1891 = vadd.f32 %v1809, %v1886
    %v1892 = vld [vmem:[%s6] sm:$0x1]
    %v1894 = vlaneseq
    %v1895 = vshrl.u32 %v1894, 7
    %v1896 = vsub.s32 0, %v1895
    %v1897 = vrot.slane %v1892, %v1896
    %v1899 = vadd.f32 %v1891, %v1897
    %v1900 = vmax.f32 %v1899, 0.0
    %v1901 = vpack.c.bf16 %v1900, %v1900
    %v1902 = vld [vmem:[#allocation5] sm:$0xf]
    %v1903 = vld [vmem:[#allocation5 + $0x4] sm:$0xf]
    %v1904 = vld [vmem:[#allocation5 + $0x8] sm:$0xf]
    %v1905 = vld [vmem:[#allocation5 + $0xc] sm:$0xf]
    %v1906 = vld [vmem:[#allocation5 + $0x10] sm:$0xf]
    %v1907 = vld [vmem:[#allocation5 + $0x14] sm:$0xf]
    %v1908 = vld [vmem:[#allocation5 + $0x18] sm:$0xf]
    %v1909 = vld [vmem:[#allocation5 + $0x1c] sm:$0xf]
    %v1910 = vld [vmem:[#allocation5 + $0x20] sm:$0xf]
    %v1911 = vld [vmem:[#allocation5 + $0x24] sm:$0xf]
    %v1912 = vld [vmem:[#allocation5 + $0x28] sm:$0xf]
    %v1913 = vld [vmem:[#allocation5 + $0x2c] sm:$0xf]
    %v1914 = vld [vmem:[#allocation5 + $0x30] sm:$0xf]
    %v1915 = vld [vmem:[#allocation5 + $0x34] sm:$0xf]
    %v1916 = vld [vmem:[#allocation5 + $0x38] sm:$0xf]
    %v1917 = vld [vmem:[#allocation5 + $0x3c] sm:$0xf]
    %v1918 = vld [vmem:[%s8] sm:$0x1]
    %v1920 = vlaneseq
    %v1921 = vshrl.u32 %v1920, 7
    %v1922 = vsub.s32 0, %v1921
    %v1923 = vrot.slane %v1918, %v1922
    %v1941 = vunpack.c.l.b16 %v1902
    %v1942 = vunpack.c.l.b16 %v1903
    %v1943 = vunpack.c.l.b16 %v1904
    %v1944 = vunpack.c.l.b16 %v1905
    %v1945 = vunpack.c.l.b16 %v1906
    %v1946 = vunpack.c.l.b16 %v1907
    %v1947 = vunpack.c.l.b16 %v1908
    %v1948 = vunpack.c.l.b16 %v1909
    %v1949 = vunpack.c.l.b16 %v1910
    %v1950 = vunpack.c.l.b16 %v1911
    %v1951 = vunpack.c.l.b16 %v1912
    %v1952 = vunpack.c.l.b16 %v1913
    %v1953 = vunpack.c.l.b16 %v1914
    %v1954 = vunpack.c.l.b16 %v1915
    %v1955 = vunpack.c.l.b16 %v1916
    %v1956 = vunpack.c.l.b16 %v1917
    %v1957 = vpack.c.b16 %v1942, %v1941
    %v1958 = vpack.c.b16 %v1944, %v1943
    %v1959 = vpack.c.b16 %v1946, %v1945
    %v1960 = vpack.c.b16 %v1948, %v1947
    %v1961 = vpack.c.b16 %v1950, %v1949
    %v1962 = vpack.c.b16 %v1952, %v1951
    %v1963 = vpack.c.b16 %v1954, %v1953
    %v1964 = vpack.c.b16 %v1956, %v1955
    %1973 = vmatprep.subr.bf16.mxu0 0
    %1974 = vmatpush1.bf16.msra.mxu0 %v1964
    %1975 = vmatprep.subr.bf16.mxu0 0
    %1976 = vmatpush1.bf16.msra.mxu0 %v1963
    %1977 = vmatprep.subr.bf16.mxu0 0
    %1978 = vmatpush1.bf16.msra.mxu0 %v1962
    %1979 = vmatprep.subr.bf16.mxu0 0
    %1980 = vmatpush1.bf16.msra.mxu0 %v1961
    %1981 = vmatprep.subr.bf16.mxu0 0
    %1982 = vmatpush1.bf16.msra.mxu0 %v1960
    %1983 = vmatprep.subr.bf16.mxu0 0
    %1984 = vmatpush1.bf16.msra.mxu0 %v1959
    %1985 = vmatprep.subr.bf16.mxu0 0
    %1986 = vmatpush1.bf16.msra.mxu0 %v1958
    %1987 = vmatprep.subr.bf16.mxu0 0
    %1988 = vmatpush1.bf16.msra.mxu0 %v1957
    %1989 = vmatprep.subr.bf16.mxu0 0
    %1990 = vmatpush2.bf16.msra.mxu0 0
    %1991 = vmatprep.subr.bf16.mxu0 0
    %1992 = vmatpush2.bf16.msra.mxu0 0
    %1993 = vmatprep.subr.bf16.mxu0 0
    %1994 = vmatpush2.bf16.msra.mxu0 0
    %1995 = vmatprep.subr.bf16.mxu0 0
    %1996 = vmatpush2.bf16.msra.mxu0 0
    %1997 = vmatprep.subr.bf16.mxu0 0
    %1998 = vmatpush2.bf16.msra.mxu0 0
    %1999 = vmatprep.subr.bf16.mxu0 0
    %2000 = vmatpush2.bf16.msra.mxu0 0
    %2001 = vmatprep.subr.bf16.mxu0 0
    %2002 = vmatpush2.bf16.msra.mxu0 0
    %2003 = vmatprep.subr.bf16.mxu0 0
    %2004 = vmatpush2.bf16.msra.mxu0 0
    %2005 = vmatprep.mubr.bf16.mxu0 0
    %2006 = vmatmul.mubr.bf16.gmra.mxu0 %v1901
    %v2007 = vpop.f32.mrf.mxu0
    %v2008 = vadd.f32 %v1923, %v2007
    %v2009 = vpop.f32.mrf.mxu0
    %v2010 = vpop.f32.mrf.mxu0
    %v2011 = vpop.f32.mrf.mxu0
    %2012 = vdwg.mxu0
    %2013 = vst [vmem:[#allocation8] sm:$0xff] %v2008
    // Predicated region
    $region42: #{tpu_custom_call.1} parent=1 // pred_check
      _
    $region43: #{tpu_custom_call.1} parent=1 // pred_check_branch
      %2015 = sbr.rel (0) target = $region45
    $region44: #{tpu_custom_call.1} parent=1 // pred_region
      %s2017 = ssub.s32 128, 128
      %2018 = vsyncadd [#allocation7], %s2017
      %s2020 = sshll.u32 [#allocation8], 4
      %s2021 = int_to_ptr.vmem [resolvable:$true] %s2020
      %2023 = dma.vmem_to_hbm [thread:$0]  %s2021, 128, %s9, [#allocation7]
    $region45: #{tpu_custom_call.1} parent=1 // pred_fallthru
      _
    // Predicated region
    $region46: #{tpu_custom_call.1} parent=1 // pred_check
      _
    $region47: #{tpu_custom_call.1} parent=1 // pred_check_branch
      %2025 = sbr.rel (0) target = $region49
    $region48: #{tpu_custom_call.1} parent=1 // pred_region
      %2026 = dma.done [#allocation7], 128
    $region49: #{tpu_custom_call.1} parent=1 // pred_fallthru
      _
    %2027 = vsyncpa [#allocation6], 1
    %2028 = vsyncpa [#allocation7], 1

</llo_original>
